<compile_context>
chip_gen: v6e
topology: v6e:2x2x1
jax: 0.10.0
libtpu: 0.0.40
codegen_flags: <defaults>
</compile_context>

<pallas_src>
import jax
import jax.numpy as jnp
from jax import lax
from jax.experimental import pallas as pl
from jax.experimental.pallas import tpu as pltpu


def _round_up(x, m):
    return (x + m - 1) // m * m


def _vmem_capacity_bytes():
    try:
        return int(pltpu.get_tpu_info().vmem_capacity_bytes)
    except Exception:
        return 64 * 1024 * 1024  # conservative (v7x per-TensorCore)


# -----------------------------------------------------------------------------
# Weight-resident path: grid only over M, full (K, N) weight stays in VMEM.
# -----------------------------------------------------------------------------
def _resident_kernel(x_ref, w_ref, v1_ref, v2_ref):
    # x_ref: (tm, K)   w_ref: (K, N)   v1_ref/v2_ref: (tm, N)
    v1_ref[...] = jnp.dot(
        x_ref[...], w_ref[...], preferred_element_type=jnp.float32
    ).astype(v1_ref.dtype)
    v2_ref[...] = jnp.maximum(v1_ref[...], 0.0)


def _pallas_resident(x2d, w_kn, vmem_cap):
    R, K = x2d.shape
    N = w_kn.shape[1]

    budget = int(vmem_cap * 0.45)

    def footprint(tm):
        # x double-buffered + weight (counted x2 conservatively) + 2 outputs x2
        return 4 * (2 * tm * K + 2 * K * N + 2 * 2 * tm * N)

    tm = min(512, _round_up(R, 8))
    while footprint(tm) > budget and tm > 8:
        tm = max(8, _round_up(max(tm // 2, 8), 8))

    # v7x megacore: guarantee >= 2 blocks along the parallel M axis.
    if pl.cdiv(R, tm) < 2 and R > 8:
        tm = max(8, _round_up(pl.cdiv(R, 2), 8))

    grid = (pl.cdiv(R, tm),)
    vmem_limit = min(int(vmem_cap * 0.9),
                     max(2 * footprint(tm), 32 * 1024 * 1024))

    cost = pl.CostEstimate(
        flops=int(2 * R * N * K),
        transcendentals=0,
        bytes_accessed=int(4 * (R * K + K * N + 2 * R * N)),
    )

    v1, v2 = pl.pallas_call(
        _resident_kernel,
        out_shape=(
            jax.ShapeDtypeStruct((R, N), jnp.float32),
            jax.ShapeDtypeStruct((R, N), jnp.float32),
        ),
        grid=grid,
        in_specs=[
            pl.BlockSpec((tm, K), lambda i: (i, 0)),
            pl.BlockSpec((K, N), lambda i: (0, 0)),   # resident: fetched once
        ],
        out_specs=(
            pl.BlockSpec((tm, N), lambda i: (i, 0)),
            pl.BlockSpec((tm, N), lambda i: (i, 0)),
        ),
        compiler_params=pltpu.CompilerParams(
            dimension_semantics=("parallel",),
            vmem_limit_bytes=vmem_limit,
        ),
        cost_estimate=cost,
    )(x2d, w_kn)
    return v1, v2


# -----------------------------------------------------------------------------
# General tiled path: (M, N, K) grid, accumulate directly into resident v1.
# -----------------------------------------------------------------------------
def _tiled_kernel(x_ref, w_ref, v1_ref, v2_ref):
    # x_ref: (tm, tk)   w_ref: (tk, tn)   v1_ref/v2_ref: (tm, tn), f32,
    # resident across the K (last, "arbitrary") grid axis.
    k = pl.program_id(2)

    @pl.when(k == 0)
    def _():
        v1_ref[...] = jnp.zeros_like(v1_ref)

    v1_ref[...] += jnp.dot(
        x_ref[...], w_ref[...], preferred_element_type=jnp.float32
    )

    @pl.when(k == pl.num_programs(2) - 1)
    def _():
        v2_ref[...] = jnp.maximum(v1_ref[...], 0.0)


def _pallas_tiled(x2d, w_kn, vmem_cap):
    R, K = x2d.shape
    N = w_kn.shape[1]

    tm = min(512, _round_up(R, 8))
    tn = min(512, _round_up(N, 128))
    tk = min(1024, _round_up(K, 128))

    budget = int(vmem_cap * 0.4)

    def footprint(tm_, tn_, tk_):
        # double-buffered x/w tiles + two resident/double-buffered output tiles
        return 4 * (2 * (tm_ * tk_ + tk_ * tn_) + 2 * 2 * tm_ * tn_)

    while footprint(tm, tn, tk) > budget and (tm > 128 or tn > 128 or tk > 256):
        if tk > 256:
            tk = _round_up(max(tk // 2, 256), 256)
        elif tm >= tn and tm > 128:
            tm = _round_up(max(tm // 2, 8), 8)
        else:
            tn = _round_up(max(tn // 2, 128), 128)

    # v7x megacore: guarantee >= 2 blocks along a parallel axis.
    if pl.cdiv(R, tm) * pl.cdiv(N, tn) < 2:
        if R > 8:
            tm = max(8, _round_up(pl.cdiv(R, 2), 8))
        elif N > 128:
            tn = max(128, _round_up(pl.cdiv(N, 2), 128))

    # Pad only K (zeros keep the accumulation exact); ragged M/N edges are
    # handled by Pallas partial-block masking -- no padded HBM copy of x.
    K_p = _round_up(K, tk)
    if K_p != K:
        x_p = jnp.pad(x2d, ((0, 0), (0, K_p - K)))
        w_p = jnp.pad(w_kn, ((0, K_p - K), (0, 0)))
    else:
        x_p, w_p = x2d, w_kn

    grid = (pl.cdiv(R, tm), pl.cdiv(N, tn), K_p // tk)
    vmem_limit = min(int(vmem_cap * 0.9),
                     max(2 * footprint(tm, tn, tk), 32 * 1024 * 1024))

    cost = pl.CostEstimate(
        flops=int(2 * R * N * K),
        transcendentals=0,
        bytes_accessed=int(4 * (R * K + K * N + 2 * R * N)),
    )

    v1, v2 = pl.pallas_call(
        _tiled_kernel,
        out_shape=(
            jax.ShapeDtypeStruct((R, N), jnp.float32),
            jax.ShapeDtypeStruct((R, N), jnp.float32),
        ),
        grid=grid,
        in_specs=[
            pl.BlockSpec((tm, tk), lambda i, j, k: (i, k)),
            pl.BlockSpec((tk, tn), lambda i, j, k: (k, j)),
        ],
        out_specs=(
            pl.BlockSpec((tm, tn), lambda i, j, k: (i, j)),
            pl.BlockSpec((tm, tn), lambda i, j, k: (i, j)),
        ),
        compiler_params=pltpu.CompilerParams(
            dimension_semantics=("parallel", "parallel", "arbitrary"),
            vmem_limit_bytes=vmem_limit,
        ),
        cost_estimate=cost,
    )(x_p, w_p)
    return v1, v2


# -----------------------------------------------------------------------------
# Public wrapper matching the PyTorch module's forward.
# -----------------------------------------------------------------------------
def model_forward(x1, weight, *, force_tiled=False):
    """x1: (B, S, F_in), weight: (F_out, F_in)  (PyTorch nn.Linear convention).

    Returns (v1, v2) matching the PyTorch module:
      v1: (B, S, F_out)
      v2: (B, S * F_out)   (relu of flattened v1)
    """
    B, S, F_in = x1.shape
    F_out = weight.shape[0]
    R = B * S

    # Tiny / sub-vreg problems (e.g. the module's 1x2x2 spec shape) or non-f32
    # dtypes: a pallas_call's fixed launch + DMA overhead dominates; plain XLA
    # fusion is strictly faster.
    if (x1.dtype != jnp.float32
            or R < 8 or F_in < 128 or F_out < 128
            or R * F_in * F_out < (1 << 18)):
        v1 = jnp.einsum("bsf,of->bso", x1, weight)
        v2 = jnp.maximum(v1.reshape(B, S * F_out), 0.0)
        return v1, v2

    vmem_cap = _vmem_capacity_bytes()
    x2d = x1.reshape(R, F_in)
    w_kn = weight.T  # one-time relayout to MXU-native (K, N), lane-dense N

    if (not force_tiled) and 4 * F_in * F_out <= 8 * 1024 * 1024:
        v1_2d, v2_2d = _pallas_resident(x2d, w_kn, vmem_cap)
    else:
        v1_2d, v2_2d = _pallas_tiled(x2d, w_kn, vmem_cap)

    v1 = v1_2d.reshape(B, S, F_out)
    v2 = v2_2d.reshape(B, S * F_out)
    return v1, v2


def _reference(x1, weight):
    B, S, _ = x1.shape
    F_out = weight.shape[0]
    v1 = jnp.einsum("bsf,of->bso", x1, weight, precision=lax.Precision.HIGHEST)
    v2 = jnp.maximum(v1.reshape(B, S * F_out), 0.0)
    return v1, v2


if __name__ == "__main__":
    key = jax.random.PRNGKey(0)
    k1, k2, k3, k4, k5, k6 = jax.random.split(key, 6)

    # --- 1) Exact shape implied by the PyTorch module: randn(1, 2, 2),
    #        Linear(2, 2, bias=False). Goes through the tiny-problem path.
    B0, S0, Fi0, Fo0 = 1, 2, 2, 2
    x_small = jax.random.normal(k1, (B0, S0, Fi0), dtype=jnp.float32)
    bound0 = 1.0 / (Fi0 ** 0.5)
    w_small = jax.random.uniform(
        k2, (Fo0, Fi0), dtype=jnp.float32, minval=-bound0, maxval=bound0)
    v1_s, v2_s = model_forward(x_small, w_small)
    jax.block_until_ready((v1_s, v2_s))
    v1_sr, v2_sr = _reference(x_small, w_small)
    assert v1_s.shape == (1, 2, 2) and v2_s.shape == (1, 4)
    assert jnp.allclose(v1_s, v1_sr, atol=1e-5, rtol=1e-5), "small v1 mismatch"
    assert jnp.allclose(v2_s, v2_sr, atol=1e-5, rtol=1e-5), "small v2 mismatch"

    # --- 2) Medium shape exercising the weight-resident Pallas path.
    B1, S1, Fi1, Fo1 = 2, 256, 1024, 256   # R = 512, weight = 1 MiB
    x_med = jax.random.normal(k3, (B1, S1, Fi1), dtype=jnp.float32)
    bound1 = 1.0 / (Fi1 ** 0.5)
    w_med = jax.random.uniform(
        k4, (Fo1, Fi1), dtype=jnp.float32, minval=-bound1, maxval=bound1)
    v1_m, v2_m = model_forward(x_med, w_med)
    jax.block_until_ready((v1_m, v2_m))
    v1_mr, v2_mr = _reference(x_med, w_med)
    assert v1_m.shape == (B1, S1, Fo1) and v2_m.shape == (B1, S1 * Fo1)
    assert jnp.allclose(v1_m, v1_mr, atol=2e-3, rtol=2e-3), "resident v1 mismatch"
    assert jnp.allclose(v2_m, v2_mr, atol=2e-3, rtol=2e-3), "resident v2 mismatch"

    # --- 3) Shape exercising the tiled (M, N, K) accumulation kernel.
    B2, S2, Fi2, Fo2 = 2, 256, 2048, 256   # R = 512, 2 K-steps when tiled
    x_big = jax.random.normal(k5, (B2, S2, Fi2), dtype=jnp.float32)
    bound2 = 1.0 / (Fi2 ** 0.5)
    w_big = jax.random.uniform(
        k6, (Fo2, Fi2), dtype=jnp.float32, minval=-bound2, maxval=bound2)
    v1_b, v2_b = model_forward(x_big, w_big, force_tiled=True)
    jax.block_until_ready((v1_b, v2_b))
    v1_br, v2_br = _reference(x_big, w_big)
    assert v1_b.shape == (B2, S2, Fo2) and v2_b.shape == (B2, S2 * Fo2)
    assert jnp.allclose(v1_b, v1_br, atol=2e-3, rtol=2e-3), "tiled v1 mismatch"
    assert jnp.allclose(v2_b, v2_br, atol=2e-3, rtol=2e-3), "tiled v2 mismatch"

    print("KERNEL_OK")
</pallas_src>

<mosaic_0001>
module attributes {stable_mosaic.version = 11 : i64} {
  func.func @_resident_kernel(%arg0: i32, %arg1: memref<256x1024xf32, #tpu.memory_space<vmem>>, %arg2: memref<1024x256xf32, #tpu.memory_space<vmem>>, %arg3: memref<256x256xf32, #tpu.memory_space<vmem>>, %arg4: memref<256x256xf32, #tpu.memory_space<vmem>>) attributes {dimension_semantics = [#tpu.dimension_semantics<parallel>], iteration_bounds = array<i64: 2>, scalar_prefetch = 0 : i64, scratch_operands = 0 : i64, tpu.core_type = #tpu.core_type<tc>, window_params = [{transform_indices = @transform_0, window_bounds = array<i64: 256, 1024>}, {pipeline_mode = #tpu.pipeline_mode<synchronous>, transform_indices = @transform_1, window_bounds = array<i64: 1024, 256>}, {transform_indices = @transform_2, window_bounds = array<i64: 256, 256>}, {transform_indices = @transform_3, window_bounds = array<i64: 256, 256>}]} {
    %c0 = arith.constant 0 : index
    %c0_0 = arith.constant 0 : index
    %0 = vector.load %arg1[%c0, %c0_0] : memref<256x1024xf32, #tpu.memory_space<vmem>>, vector<256x1024xf32>
    %c0_1 = arith.constant 0 : index
    %c0_2 = arith.constant 0 : index
    %1 = vector.load %arg2[%c0_1, %c0_2] : memref<1024x256xf32, #tpu.memory_space<vmem>>, vector<1024x256xf32>
    %cst = arith.constant dense<0.000000e+00> : vector<256x256xf32>
    %2 = tpu.matmul %0, %1, %cst {dimension_numbers = #tpu.dot_dimension_numbers<[1], [0], [0], [1], [0, 0, 1, 1], [], []>} : vector<256x1024xf32>, vector<1024x256xf32>, vector<256x256xf32> -> vector<256x256xf32>
    %c0_3 = arith.constant 0 : index
    %c0_4 = arith.constant 0 : index
    %3 = vector.load %arg3[%c0_3, %c0_4] : memref<256x256xf32, #tpu.memory_space<vmem>>, vector<256x256xf32>
    tpu.vector_store %arg3[%c0_3, %c0_4], %2 {strides = array<i32>} : memref<256x256xf32, #tpu.memory_space<vmem>>, vector<256x256xf32>,
    %c0_5 = arith.constant 0 : index
    %c0_6 = arith.constant 0 : index
    %4 = vector.load %arg3[%c0_5, %c0_6] : memref<256x256xf32, #tpu.memory_space<vmem>>, vector<256x256xf32>
    %cst_7 = arith.constant 0.000000e+00 : f32
    %5 = vector.broadcast %cst_7 : f32 to vector<256x256xf32>
    %6 = arith.maximumf %4, %5 : vector<256x256xf32>
    %c0_8 = arith.constant 0 : index
    %c0_9 = arith.constant 0 : index
    %7 = vector.load %arg4[%c0_8, %c0_9] : memref<256x256xf32, #tpu.memory_space<vmem>>, vector<256x256xf32>
    tpu.vector_store %arg4[%c0_8, %c0_9], %6 {strides = array<i32>} : memref<256x256xf32, #tpu.memory_space<vmem>>, vector<256x256xf32>,
    return
  }
  func.func @transform_0(%arg0: i32) -> (i32, i32) {
    %c0_i32 = arith.constant 0 : i32
    %c0_i32_0 = arith.constant 0 : i32
    return %arg0, %c0_i32 : i32, i32
  }
  func.func @transform_1(%arg0: i32) -> (i32, i32) {
    %c0_i32 = arith.constant 0 : i32
    %c0_i32_0 = arith.constant 0 : i32
    %c0_i32_1 = arith.constant 0 : i32
    return %c0_i32, %c0_i32_0 : i32, i32
  }
  func.func @transform_2(%arg0: i32) -> (i32, i32) {
    %c0_i32 = arith.constant 0 : i32
    %c0_i32_0 = arith.constant 0 : i32
    return %arg0, %c0_i32 : i32, i32
  }
  func.func @transform_3(%arg0: i32) -> (i32, i32) {
    %c0_i32 = arith.constant 0 : i32
    %c0_i32_0 = arith.constant 0 : i32
    return %arg0, %c0_i32 : i32, i32
  }
}

</mosaic_0001>

<llo_original>
// kernel: tpu_custom_call.1
$region0: #{tpu_custom_call.1}
  #allocation0 [shape = 'u32[]', space=smem, size = 0x4, offset = 0x4, fixed_abs, tag = 'smem constant byte address 0x4 - core index']
  #allocation1 [shape = 'u32[144,128]{1,0:T(1,128)}', space=vmem, size = 0x12000, scoped, tag = 'internal scratch']
  %s0 = inlined_call_operand.hbm [shape: f32[512,1024], index: 0, kind: input, shape index: {}]
  %s1 = inlined_call_operand.hbm [shape: f32[1024,256], index: 1, kind: input, shape index: {}]
  %s2 = inlined_call_operand.hbm [shape: f32[512,256], index: 2, kind: output, shape index: {0}]
  %s3 = inlined_call_operand.hbm [shape: f32[512,256], index: 3, kind: output, shape index: {1}]
  %4 = xla_tuple %s2, %s3
  %s5 = sld [smem:[#allocation0]]
  $region57: #{tpu_custom_call.1} parent=0
    _
  %s7 = ssub.s32 1, %s5
  %s8 = scalar_select 0, %s7, %s5
  $region1: #{tpu_custom_call.1} parent=0
    #allocation2 [shape = 'u8[2097152]{0}', space=vmem, size = 0x200000, scoped, tag = 'input window, operand 0']
    #allocation3 [shape = 's32[2]{0}', space=sflag, size = 0x8, scoped, tag = 'scoped memory for tpu_custom_call.1']
    #allocation4 [shape = 's32[2]{0}', space=sflag, size = 0x8, scoped, tag = 'scoped memory for tpu_custom_call.1']
    #allocation5 [shape = 'u8[1048576]{0}', space=vmem, size = 0x100000, scoped, tag = 'input window, operand 1, single buffered']
    #allocation6 [shape = 's32[1]{0}', space=sflag, size = 0x4, scoped, tag = 'scoped memory for tpu_custom_call.1']
    #allocation7 [shape = 'u8[524288]{0}', space=vmem, size = 0x80000, scoped, tag = 'output window, operand 0']
    #allocation8 [shape = 'u8[524288]{0}', space=vmem, size = 0x80000, scoped, tag = 'output window, operand 1']
    #allocation9 [shape = 's32[2]{0}', space=sflag, size = 0x8, scoped, tag = 'scoped memory for tpu_custom_call.1']
    %9 = vsyncpa [#allocation3], 0
    %s10 = scalar_lea.sflag [#allocation3], 1
    %11 = vsyncpa %s10, 0
    %12 = vsyncpa [#allocation6], 0
    %13 = vsyncpa [#allocation4], 0
    %s14 = scalar_lea.sflag [#allocation4], 1
    %15 = vsyncpa %s14, 0
    %16 = vsyncpa [#allocation9], 0
    %s17 = scalar_lea.sflag [#allocation9], 1
    %18 = vsyncpa %s17, 0
    loop: start=0, step=1, limit=4
    $region2: #{tpu_custom_call.1} parent=1 // loop_pre_header
      _
    $region3: #{tpu_custom_call.1} parent=1 // loop_header
      %s20 = sphi 0, %s24
      %p21 = scmp.ge.s32.totalorder %s20, 4
      %s30 = sphi 0, %s32
      %s33 = sphi 0, %s30
      %s34 = sphi 0, %s33
      %s50 = sphi 0, %s34
      %s54 = sphi 0, %s54
      %s56 = sphi 0, %s54
      %s57 = sphi 0, %s56
      %s71 = sphi 0, %s57
      %s77 = sphi 0, %s79
      %s80 = sphi 0, %s77
      %s81 = sphi 0, %s80
      %s97 = sphi 0, %s81
      %s103 = sphi 0, %s105
      %s106 = sphi 0, %s103
      %s107 = sphi 0, %s106
      %s123 = sphi 0, %s107
    $region4: #{tpu_custom_call.1} parent=1 // loop_header_branch
      %23 = sbr.rel (%p21) target = $region8
    $region5: #{tpu_custom_call.1} parent=1 // loop_body
      %s25 = ssub.s32 %s20, 1
      %s26 = ssub.s32 %s20, 2
      %s27 = sadd.s32 %s20, 1
      %s28 = ssub.s32 %s20, %s27
      %p29 = scmp.eq.s32.totalorder %s28, 0
      %s31 = sadd.s32 %s30, 1
      %s32 = scalar_select %p29, %s30, %s31
      %p35 = pneg %p29
      %p36 = scmp.eq.s32.totalorder %s20, 1
      %p37 = por %p35, %p36
      %p38 = scmp.ne.s32.totalorder %s30, %s33
      %p39 = scmp.eq.s32.totalorder %s20, 0
      %p40 = por %p38, %p39
      %p41 = scmp.ne.s32.totalorder %s30, %s33
      %p42 = scmp.eq.s32.totalorder %s25, 1
      %p43 = por %p41, %p42
      %p44 = scmp.ne.s32.totalorder %s33, %s34
      %p45 = scmp.eq.s32.totalorder %s25, 0
      %p46 = por %p44, %p45
      %p47 = scmp.ne.s32.totalorder %s33, %s34
      %p48 = scmp.eq.s32.totalorder %s26, 1
      %p49 = por %p47, %p48
      %p51 = scmp.ne.s32.totalorder %s34, %s50
      %p52 = scmp.eq.s32.totalorder %s26, 0
      %p53 = por %p51, %p52
      %s55 = sadd.s32 %s54, 1
      %p58 = scmp.eq.s32.totalorder %s20, 1
      %p59 = scmp.ne.s32.totalorder %s54, %s56
      %p60 = scmp.eq.s32.totalorder %s20, 0
      %p61 = por %p59, %p60
      %p62 = scmp.ne.s32.totalorder %s54, %s56
      %p63 = scmp.eq.s32.totalorder %s25, 1
      %p64 = por %p62, %p63
      %p65 = scmp.ne.s32.totalorder %s56, %s57
      %p66 = scmp.eq.s32.totalorder %s25, 0
      %p67 = por %p65, %p66
      %p68 = scmp.ne.s32.totalorder %s56, %s57
      %p69 = scmp.eq.s32.totalorder %s26, 1
      %p70 = por %p68, %p69
      %p72 = scmp.ne.s32.totalorder %s57, %s71
      %p73 = scmp.eq.s32.totalorder %s26, 0
      %p74 = por %p72, %p73
      %s75 = ssub.s32 %s20, %s27
      %p76 = scmp.eq.s32.totalorder %s75, 0
      %s78 = sadd.s32 %s77, 1
      %s79 = scalar_select %p76, %s77, %s78
      %p82 = pneg %p76
      %p83 = scmp.eq.s32.totalorder %s20, 1
      %p84 = por %p82, %p83
      %p85 = scmp.ne.s32.totalorder %s77, %s80
      %p86 = scmp.eq.s32.totalorder %s20, 0
      %p87 = por %p85, %p86
      %p88 = scmp.ne.s32.totalorder %s77, %s80
      %p89 = scmp.eq.s32.totalorder %s25, 1
      %p90 = por %p88, %p89
      %p91 = scmp.ne.s32.totalorder %s80, %s81
      %p92 = scmp.eq.s32.totalorder %s25, 0
      %p93 = por %p91, %p92
      %p94 = scmp.ne.s32.totalorder %s80, %s81
      %p95 = scmp.eq.s32.totalorder %s26, 1
      %p96 = por %p94, %p95
      %p98 = scmp.ne.s32.totalorder %s81, %s97
      %p99 = scmp.eq.s32.totalorder %s26, 0
      %p100 = por %p98, %p99
      %s101 = ssub.s32 %s20, %s27
      %p102 = scmp.eq.s32.totalorder %s101, 0
      %s104 = sadd.s32 %s103, 1
      %s105 = scalar_select %p102, %s103, %s104
      %p108 = pneg %p102
      %p109 = scmp.eq.s32.totalorder %s20, 1
      %p110 = por %p108, %p109
      %p111 = scmp.ne.s32.totalorder %s103, %s106
      %p112 = scmp.eq.s32.totalorder %s20, 0
      %p113 = por %p111, %p112
      %p114 = scmp.ne.s32.totalorder %s103, %s106
      %p115 = scmp.eq.s32.totalorder %s25, 1
      %p116 = por %p114, %p115
      %p117 = scmp.ne.s32.totalorder %s106, %s107
      %p118 = scmp.eq.s32.totalorder %s25, 0
      %p119 = por %p117, %p118
      %p120 = scmp.ne.s32.totalorder %s106, %s107
      %p121 = scmp.eq.s32.totalorder %s26, 1
      %p122 = por %p120, %p121
      %p124 = scmp.ne.s32.totalorder %s107, %s123
      %p125 = scmp.eq.s32.totalorder %s26, 0
      %p126 = por %p124, %p125
      %p127 = scmp.le.s32.totalorder 1, %s20
      %p128 = scmp.lt.s32.totalorder %s20, 3
      %p129 = pnand %p127, %p128
      %p130 = pneg %p129
      // Predicated region
      $region9: #{tpu_custom_call.1} parent=5 // pred_check
        _
      $region10: #{tpu_custom_call.1} parent=5 // pred_check_branch
        %132 = sbr.rel (%p129) target = $region12
      $region11: #{tpu_custom_call.1} parent=5 // pred_region
        %s133 = ssub.s32 %s20, 1
        // Predicated region
        $region13: #{tpu_custom_call.1} parent=11 // pred_check
          %p134 = pneg %p67
        $region14: #{tpu_custom_call.1} parent=11 // pred_check_branch
          %136 = sbr.rel (%p134) target = $region16
        $region15: #{tpu_custom_call.1} parent=11 // pred_region
          %s138 = ssub.s32 32768, 32768
          %139 = vsyncadd [#allocation6], %s138
          %s140 = sshll.u32 [#allocation5], 4
          %s141 = int_to_ptr.vmem [resolvable:$true] %s140
          %146 = dma.hbm_to_vmem [thread:$0]  %s1, 32768, %s141, [#allocation6], 256, 256, 16
        $region16: #{tpu_custom_call.1} parent=11 // pred_fallthru
          _
      $region12: #{tpu_custom_call.1} parent=5 // pred_fallthru
        _
      %p147 = scmp.lt.s32.totalorder %s20, 2
      // Predicated region
      $region17: #{tpu_custom_call.1} parent=5 // pred_check
        %p148 = pneg %p147
      $region18: #{tpu_custom_call.1} parent=5 // pred_check_branch
        %150 = sbr.rel (%p148) target = $region20
      $region19: #{tpu_custom_call.1} parent=5 // pred_region
        // Predicated region
        $region21: #{tpu_custom_call.1} parent=19 // pred_check
          %p151 = pneg %p40
        $region22: #{tpu_custom_call.1} parent=19 // pred_check_branch
          %153 = sbr.rel (%p151) target = $region24
        $region23: #{tpu_custom_call.1} parent=19 // pred_region
          %s154 = sand.u32 %s30, 1
          %s155 = scalar_lea.sflag [#allocation3], %s154
          %s156 = sand.u32 %s30, 1
          %s157 = smul.addr %s156, 2048
          %s158 = scalar_lea.vmem [#allocation2], %s157
          %s159 = smul.u32 32, %s20
          %s161 = ssub.s32 32768, 32768
          %162 = vsyncadd %s155, %s161
          %s163 = smul.addr %s159, 8
          %s164 = smul.addr %s163, 128
          %s165 = scalar_lea.hbm %s0, %s164
          %s166 = sshll.u32 %s158, 4
          %s167 = int_to_ptr.vmem [resolvable:$true] %s166
          %172 = dma.hbm_to_vmem [thread:$0]  %s165, 32768, %s167, %s155, 1024, 1024, 64
        $region24: #{tpu_custom_call.1} parent=19 // pred_fallthru
          _
      $region20: #{tpu_custom_call.1} parent=5 // pred_fallthru
        _
      %p173 = scmp.le.s32.totalorder 1, %s20
      %p174 = scmp.lt.s32.totalorder %s20, 3
      %p175 = pnand %p173, %p174
      %p176 = pneg %p175
      // Predicated region
      $region25: #{tpu_custom_call.1} parent=5 // pred_check
        _
      $region26: #{tpu_custom_call.1} parent=5 // pred_check_branch
        %178 = sbr.rel (%p175) target = $region28
      $region27: #{tpu_custom_call.1} parent=5 // pred_region
        %s179 = ssub.s32 %s20, 1
        %s180 = sand.u32 %s33, 1
        %s181 = scalar_lea.sflag [#allocation3], %s180
        %s182 = sand.u32 %s33, 1
        %s183 = smul.addr %s182, 2048
        %s184 = scalar_lea.vmem [#allocation2], %s183
        // Predicated region
        $region29: #{tpu_custom_call.1} parent=27 // pred_check
          %p185 = pneg %p46
        $region30: #{tpu_custom_call.1} parent=27 // pred_check_branch
          %187 = sbr.rel (%p185) target = $region32
        $region31: #{tpu_custom_call.1} parent=27 // pred_region
          %188 = dma.done %s181, 32768
        $region32: #{tpu_custom_call.1} parent=27 // pred_fallthru
          _
        // Predicated region
        $region33: #{tpu_custom_call.1} parent=27 // pred_check
          %p189 = pneg %p67
        $region34: #{tpu_custom_call.1} parent=27 // pred_check_branch
          %191 = sbr.rel (%p189) target = $region36
        $region35: #{tpu_custom_call.1} parent=27 // pred_region
          %192 = dma.done [#allocation6], 32768
        $region36: #{tpu_custom_call.1} parent=27 // pred_fallthru
          _
        %s193 = sand.u32 %s33, 1
        %s194 = scalar_lea.sflag [#allocation3], %s193
        %s195 = sand.u32 %s33, 1
        %s196 = smul.addr %s195, 2048
        %s197 = scalar_lea.vmem [#allocation2], %s196
        %p198 = pneg %p46
        %p199 = pneg %p43
        %p200 = pneg %p67
        %p201 = pneg %p64
        %p202 = pneg %p93
        %p203 = pneg %p90
        %s204 = sand.u32 %s80, 1
        %s205 = scalar_lea.sflag [#allocation4], %s204
        %s206 = sand.u32 %s80, 1
        %s207 = smul.addr %s206, 512
        %s208 = scalar_lea.vmem [#allocation7], %s207
        %p209 = pneg %p119
        %p210 = pneg %p116
        %s211 = sand.u32 %s106, 1
        %s212 = scalar_lea.sflag [#allocation9], %s211
        %s213 = sand.u32 %s106, 1
        %s214 = smul.addr %s213, 512
        %s215 = scalar_lea.vmem [#allocation8], %s214
        %s216 = smul.u32 32, %s25
        %s217 = smul.u32 32, %s25
        %s218 = smul.u32 32, %s25
        %v219 = vld [vmem:[%s184] sm:$0xff]
        %v220 = vld [vmem:[%s184 + $0x8] sm:$0xff]
        %v221 = vld [vmem:[%s184 + $0x10] sm:$0xff]
        %v222 = vld [vmem:[%s184 + $0x18] sm:$0xff]
        %v223 = vld [vmem:[%s184 + $0x20] sm:$0xff]
        %v224 = vld [vmem:[%s184 + $0x28] sm:$0xff]
        %v225 = vld [vmem:[%s184 + $0x30] sm:$0xff]
        %v226 = vld [vmem:[%s184 + $0x38] sm:$0xff]
        %v227 = vld [vmem:[%s184 + $0x40] sm:$0xff]
        %v228 = vld [vmem:[%s184 + $0x48] sm:$0xff]
        %v229 = vld [vmem:[%s184 + $0x50] sm:$0xff]
        %v230 = vld [vmem:[%s184 + $0x58] sm:$0xff]
        %v231 = vld [vmem:[%s184 + $0x60] sm:$0xff]
        %v232 = vld [vmem:[%s184 + $0x68] sm:$0xff]
        %v233 = vld [vmem:[%s184 + $0x70] sm:$0xff]
        %v234 = vld [vmem:[%s184 + $0x78] sm:$0xff]
        %v235 = vld [vmem:[%s184 + $0x80] sm:$0xff]
        %v236 = vld [vmem:[%s184 + $0x88] sm:$0xff]
        %v237 = vld [vmem:[%s184 + $0x90] sm:$0xff]
        %v238 = vld [vmem:[%s184 + $0x98] sm:$0xff]
        %v239 = vld [vmem:[%s184 + $0xa0] sm:$0xff]
        %v240 = vld [vmem:[%s184 + $0xa8] sm:$0xff]
        %v241 = vld [vmem:[%s184 + $0xb0] sm:$0xff]
        %v242 = vld [vmem:[%s184 + $0xb8] sm:$0xff]
        %v243 = vld [vmem:[%s184 + $0xc0] sm:$0xff]
        %v244 = vld [vmem:[%s184 + $0xc8] sm:$0xff]
        %v245 = vld [vmem:[%s184 + $0xd0] sm:$0xff]
        %v246 = vld [vmem:[%s184 + $0xd8] sm:$0xff]
        %v247 = vld [vmem:[%s184 + $0xe0] sm:$0xff]
        %v248 = vld [vmem:[%s184 + $0xe8] sm:$0xff]
        %v249 = vld [vmem:[%s184 + $0xf0] sm:$0xff]
        %v250 = vld [vmem:[%s184 + $0xf8] sm:$0xff]
        %v251 = vld [vmem:[%s184 + $0x100] sm:$0xff]
        %v252 = vld [vmem:[%s184 + $0x108] sm:$0xff]
        %v253 = vld [vmem:[%s184 + $0x110] sm:$0xff]
        %v254 = vld [vmem:[%s184 + $0x118] sm:$0xff]
        %v255 = vld [vmem:[%s184 + $0x120] sm:$0xff]
        %v256 = vld [vmem:[%s184 + $0x128] sm:$0xff]
        %v257 = vld [vmem:[%s184 + $0x130] sm:$0xff]
        %v258 = vld [vmem:[%s184 + $0x138] sm:$0xff]
        %v259 = vld [vmem:[%s184 + $0x140] sm:$0xff]
        %v260 = vld [vmem:[%s184 + $0x148] sm:$0xff]
        %v261 = vld [vmem:[%s184 + $0x150] sm:$0xff]
        %v262 = vld [vmem:[%s184 + $0x158] sm:$0xff]
        %v263 = vld [vmem:[%s184 + $0x160] sm:$0xff]
        %v264 = vld [vmem:[%s184 + $0x168] sm:$0xff]
        %v265 = vld [vmem:[%s184 + $0x170] sm:$0xff]
        %v266 = vld [vmem:[%s184 + $0x178] sm:$0xff]
        %v267 = vld [vmem:[%s184 + $0x180] sm:$0xff]
        %v268 = vld [vmem:[%s184 + $0x188] sm:$0xff]
        %v269 = vld [vmem:[%s184 + $0x190] sm:$0xff]
        %v270 = vld [vmem:[%s184 + $0x198] sm:$0xff]
        %v271 = vld [vmem:[%s184 + $0x1a0] sm:$0xff]
        %v272 = vld [vmem:[%s184 + $0x1a8] sm:$0xff]
        %v273 = vld [vmem:[%s184 + $0x1b0] sm:$0xff]
        %v274 = vld [vmem:[%s184 + $0x1b8] sm:$0xff]
        %v275 = vld [vmem:[%s184 + $0x1c0] sm:$0xff]
        %v276 = vld [vmem:[%s184 + $0x1c8] sm:$0xff]
        %v277 = vld [vmem:[%s184 + $0x1d0] sm:$0xff]
        %v278 = vld [vmem:[%s184 + $0x1d8] sm:$0xff]
        %v279 = vld [vmem:[%s184 + $0x1e0] sm:$0xff]
        %v280 = vld [vmem:[%s184 + $0x1e8] sm:$0xff]
        %v281 = vld [vmem:[%s184 + $0x1f0] sm:$0xff]
        %v282 = vld [vmem:[%s184 + $0x1f8] sm:$0xff]
        %v283 = vld [vmem:[%s184 + $0x200] sm:$0xff]
        %v284 = vld [vmem:[%s184 + $0x208] sm:$0xff]
        %v285 = vld [vmem:[%s184 + $0x210] sm:$0xff]
        %v286 = vld [vmem:[%s184 + $0x218] sm:$0xff]
        %v287 = vld [vmem:[%s184 + $0x220] sm:$0xff]
        %v288 = vld [vmem:[%s184 + $0x228] sm:$0xff]
        %v289 = vld [vmem:[%s184 + $0x230] sm:$0xff]
        %v290 = vld [vmem:[%s184 + $0x238] sm:$0xff]
        %v291 = vld [vmem:[%s184 + $0x240] sm:$0xff]
        %v292 = vld [vmem:[%s184 + $0x248] sm:$0xff]
        %v293 = vld [vmem:[%s184 + $0x250] sm:$0xff]
        %v294 = vld [vmem:[%s184 + $0x258] sm:$0xff]
        %v295 = vld [vmem:[%s184 + $0x260] sm:$0xff]
        %v296 = vld [vmem:[%s184 + $0x268] sm:$0xff]
        %v297 = vld [vmem:[%s184 + $0x270] sm:$0xff]
        %v298 = vld [vmem:[%s184 + $0x278] sm:$0xff]
        %v299 = vld [vmem:[%s184 + $0x280] sm:$0xff]
        %v300 = vld [vmem:[%s184 + $0x288] sm:$0xff]
        %v301 = vld [vmem:[%s184 + $0x290] sm:$0xff]
        %v302 = vld [vmem:[%s184 + $0x298] sm:$0xff]
        %v303 = vld [vmem:[%s184 + $0x2a0] sm:$0xff]
        %v304 = vld [vmem:[%s184 + $0x2a8] sm:$0xff]
        %v305 = vld [vmem:[%s184 + $0x2b0] sm:$0xff]
        %v306 = vld [vmem:[%s184 + $0x2b8] sm:$0xff]
        %v307 = vld [vmem:[%s184 + $0x2c0] sm:$0xff]
        %v308 = vld [vmem:[%s184 + $0x2c8] sm:$0xff]
        %v309 = vld [vmem:[%s184 + $0x2d0] sm:$0xff]
        %v310 = vld [vmem:[%s184 + $0x2d8] sm:$0xff]
        %v311 = vld [vmem:[%s184 + $0x2e0] sm:$0xff]
        %v312 = vld [vmem:[%s184 + $0x2e8] sm:$0xff]
        %v313 = vld [vmem:[%s184 + $0x2f0] sm:$0xff]
        %v314 = vld [vmem:[%s184 + $0x2f8] sm:$0xff]
        %v315 = vld [vmem:[%s184 + $0x300] sm:$0xff]
        %v316 = vld [vmem:[%s184 + $0x308] sm:$0xff]
        %v317 = vld [vmem:[%s184 + $0x310] sm:$0xff]
        %v318 = vld [vmem:[%s184 + $0x318] sm:$0xff]
        %v319 = vld [vmem:[%s184 + $0x320] sm:$0xff]
        %v320 = vld [vmem:[%s184 + $0x328] sm:$0xff]
        %v321 = vld [vmem:[%s184 + $0x330] sm:$0xff]
        %v322 = vld [vmem:[%s184 + $0x338] sm:$0xff]
        %v323 = vld [vmem:[%s184 + $0x340] sm:$0xff]
        %v324 = vld [vmem:[%s184 + $0x348] sm:$0xff]
        %v325 = vld [vmem:[%s184 + $0x350] sm:$0xff]
        %v326 = vld [vmem:[%s184 + $0x358] sm:$0xff]
        %v327 = vld [vmem:[%s184 + $0x360] sm:$0xff]
        %v328 = vld [vmem:[%s184 + $0x368] sm:$0xff]
        %v329 = vld [vmem:[%s184 + $0x370] sm:$0xff]
        %v330 = vld [vmem:[%s184 + $0x378] sm:$0xff]
        %v331 = vld [vmem:[%s184 + $0x380] sm:$0xff]
        %v332 = vld [vmem:[%s184 + $0x388] sm:$0xff]
        %v333 = vld [vmem:[%s184 + $0x390] sm:$0xff]
        %v334 = vld [vmem:[%s184 + $0x398] sm:$0xff]
        %v335 = vld [vmem:[%s184 + $0x3a0] sm:$0xff]
        %v336 = vld [vmem:[%s184 + $0x3a8] sm:$0xff]
        %v337 = vld [vmem:[%s184 + $0x3b0] sm:$0xff]
        %v338 = vld [vmem:[%s184 + $0x3b8] sm:$0xff]
        %v339 = vld [vmem:[%s184 + $0x3c0] sm:$0xff]
        %v340 = vld [vmem:[%s184 + $0x3c8] sm:$0xff]
        %v341 = vld [vmem:[%s184 + $0x3d0] sm:$0xff]
        %v342 = vld [vmem:[%s184 + $0x3d8] sm:$0xff]
        %v343 = vld [vmem:[%s184 + $0x3e0] sm:$0xff]
        %v344 = vld [vmem:[%s184 + $0x3e8] sm:$0xff]
        %v345 = vld [vmem:[%s184 + $0x3f0] sm:$0xff]
        %v346 = vld [vmem:[%s184 + $0x3f8] sm:$0xff]
        %v347 = vld [vmem:[%s184 + $0x400] sm:$0xff]
        %v348 = vld [vmem:[%s184 + $0x408] sm:$0xff]
        %v349 = vld [vmem:[%s184 + $0x410] sm:$0xff]
        %v350 = vld [vmem:[%s184 + $0x418] sm:$0xff]
        %v351 = vld [vmem:[%s184 + $0x420] sm:$0xff]
        %v352 = vld [vmem:[%s184 + $0x428] sm:$0xff]
        %v353 = vld [vmem:[%s184 + $0x430] sm:$0xff]
        %v354 = vld [vmem:[%s184 + $0x438] sm:$0xff]
        %v355 = vld [vmem:[%s184 + $0x440] sm:$0xff]
        %v356 = vld [vmem:[%s184 + $0x448] sm:$0xff]
        %v357 = vld [vmem:[%s184 + $0x450] sm:$0xff]
        %v358 = vld [vmem:[%s184 + $0x458] sm:$0xff]
        %v359 = vld [vmem:[%s184 + $0x460] sm:$0xff]
        %v360 = vld [vmem:[%s184 + $0x468] sm:$0xff]
        %v361 = vld [vmem:[%s184 + $0x470] sm:$0xff]
        %v362 = vld [vmem:[%s184 + $0x478] sm:$0xff]
        %v363 = vld [vmem:[%s184 + $0x480] sm:$0xff]
        %v364 = vld [vmem:[%s184 + $0x488] sm:$0xff]
        %v365 = vld [vmem:[%s184 + $0x490] sm:$0xff]
        %v366 = vld [vmem:[%s184 + $0x498] sm:$0xff]
        %v367 = vld [vmem:[%s184 + $0x4a0] sm:$0xff]
        %v368 = vld [vmem:[%s184 + $0x4a8] sm:$0xff]
        %v369 = vld [vmem:[%s184 + $0x4b0] sm:$0xff]
        %v370 = vld [vmem:[%s184 + $0x4b8] sm:$0xff]
        %v371 = vld [vmem:[%s184 + $0x4c0] sm:$0xff]
        %v372 = vld [vmem:[%s184 + $0x4c8] sm:$0xff]
        %v373 = vld [vmem:[%s184 + $0x4d0] sm:$0xff]
        %v374 = vld [vmem:[%s184 + $0x4d8] sm:$0xff]
        %v375 = vld [vmem:[%s184 + $0x4e0] sm:$0xff]
        %v376 = vld [vmem:[%s184 + $0x4e8] sm:$0xff]
        %v377 = vld [vmem:[%s184 + $0x4f0] sm:$0xff]
        %v378 = vld [vmem:[%s184 + $0x4f8] sm:$0xff]
        %v379 = vld [vmem:[%s184 + $0x500] sm:$0xff]
        %v380 = vld [vmem:[%s184 + $0x508] sm:$0xff]
        %v381 = vld [vmem:[%s184 + $0x510] sm:$0xff]
        %v382 = vld [vmem:[%s184 + $0x518] sm:$0xff]
        %v383 = vld [vmem:[%s184 + $0x520] sm:$0xff]
        %v384 = vld [vmem:[%s184 + $0x528] sm:$0xff]
        %v385 = vld [vmem:[%s184 + $0x530] sm:$0xff]
        %v386 = vld [vmem:[%s184 + $0x538] sm:$0xff]
        %v387 = vld [vmem:[%s184 + $0x540] sm:$0xff]
        %v388 = vld [vmem:[%s184 + $0x548] sm:$0xff]
        %v389 = vld [vmem:[%s184 + $0x550] sm:$0xff]
        %v390 = vld [vmem:[%s184 + $0x558] sm:$0xff]
        %v391 = vld [vmem:[%s184 + $0x560] sm:$0xff]
        %v392 = vld [vmem:[%s184 + $0x568] sm:$0xff]
        %v393 = vld [vmem:[%s184 + $0x570] sm:$0xff]
        %v394 = vld [vmem:[%s184 + $0x578] sm:$0xff]
        %v395 = vld [vmem:[%s184 + $0x580] sm:$0xff]
        %v396 = vld [vmem:[%s184 + $0x588] sm:$0xff]
        %v397 = vld [vmem:[%s184 + $0x590] sm:$0xff]
        %v398 = vld [vmem:[%s184 + $0x598] sm:$0xff]
        %v399 = vld [vmem:[%s184 + $0x5a0] sm:$0xff]
        %v400 = vld [vmem:[%s184 + $0x5a8] sm:$0xff]
        %v401 = vld [vmem:[%s184 + $0x5b0] sm:$0xff]
        %v402 = vld [vmem:[%s184 + $0x5b8] sm:$0xff]
        %v403 = vld [vmem:[%s184 + $0x5c0] sm:$0xff]
        %v404 = vld [vmem:[%s184 + $0x5c8] sm:$0xff]
        %v405 = vld [vmem:[%s184 + $0x5d0] sm:$0xff]
        %v406 = vld [vmem:[%s184 + $0x5d8] sm:$0xff]
        %v407 = vld [vmem:[%s184 + $0x5e0] sm:$0xff]
        %v408 = vld [vmem:[%s184 + $0x5e8] sm:$0xff]
        %v409 = vld [vmem:[%s184 + $0x5f0] sm:$0xff]
        %v410 = vld [vmem:[%s184 + $0x5f8] sm:$0xff]
        %v411 = vld [vmem:[%s184 + $0x600] sm:$0xff]
        %v412 = vld [vmem:[%s184 + $0x608] sm:$0xff]
        %v413 = vld [vmem:[%s184 + $0x610] sm:$0xff]
        %v414 = vld [vmem:[%s184 + $0x618] sm:$0xff]
        %v415 = vld [vmem:[%s184 + $0x620] sm:$0xff]
        %v416 = vld [vmem:[%s184 + $0x628] sm:$0xff]
        %v417 = vld [vmem:[%s184 + $0x630] sm:$0xff]
        %v418 = vld [vmem:[%s184 + $0x638] sm:$0xff]
        %v419 = vld [vmem:[%s184 + $0x640] sm:$0xff]
        %v420 = vld [vmem:[%s184 + $0x648] sm:$0xff]
        %v421 = vld [vmem:[%s184 + $0x650] sm:$0xff]
        %v422 = vld [vmem:[%s184 + $0x658] sm:$0xff]
        %v423 = vld [vmem:[%s184 + $0x660] sm:$0xff]
        %v424 = vld [vmem:[%s184 + $0x668] sm:$0xff]
        %v425 = vld [vmem:[%s184 + $0x670] sm:$0xff]
        %v426 = vld [vmem:[%s184 + $0x678] sm:$0xff]
        %v427 = vld [vmem:[%s184 + $0x680] sm:$0xff]
        %v428 = vld [vmem:[%s184 + $0x688] sm:$0xff]
        %v429 = vld [vmem:[%s184 + $0x690] sm:$0xff]
        %v430 = vld [vmem:[%s184 + $0x698] sm:$0xff]
        %v431 = vld [vmem:[%s184 + $0x6a0] sm:$0xff]
        %v432 = vld [vmem:[%s184 + $0x6a8] sm:$0xff]
        %v433 = vld [vmem:[%s184 + $0x6b0] sm:$0xff]
        %v434 = vld [vmem:[%s184 + $0x6b8] sm:$0xff]
        %v435 = vld [vmem:[%s184 + $0x6c0] sm:$0xff]
        %v436 = vld [vmem:[%s184 + $0x6c8] sm:$0xff]
        %v437 = vld [vmem:[%s184 + $0x6d0] sm:$0xff]
        %v438 = vld [vmem:[%s184 + $0x6d8] sm:$0xff]
        %v439 = vld [vmem:[%s184 + $0x6e0] sm:$0xff]
        %v440 = vld [vmem:[%s184 + $0x6e8] sm:$0xff]
        %v441 = vld [vmem:[%s184 + $0x6f0] sm:$0xff]
        %v442 = vld [vmem:[%s184 + $0x6f8] sm:$0xff]
        %v443 = vld [vmem:[%s184 + $0x700] sm:$0xff]
        %v444 = vld [vmem:[%s184 + $0x708] sm:$0xff]
        %v445 = vld [vmem:[%s184 + $0x710] sm:$0xff]
        %v446 = vld [vmem:[%s184 + $0x718] sm:$0xff]
        %v447 = vld [vmem:[%s184 + $0x720] sm:$0xff]
        %v448 = vld [vmem:[%s184 + $0x728] sm:$0xff]
        %v449 = vld [vmem:[%s184 + $0x730] sm:$0xff]
        %v450 = vld [vmem:[%s184 + $0x738] sm:$0xff]
        %v451 = vld [vmem:[%s184 + $0x740] sm:$0xff]
        %v452 = vld [vmem:[%s184 + $0x748] sm:$0xff]
        %v453 = vld [vmem:[%s184 + $0x750] sm:$0xff]
        %v454 = vld [vmem:[%s184 + $0x758] sm:$0xff]
        %v455 = vld [vmem:[%s184 + $0x760] sm:$0xff]
        %v456 = vld [vmem:[%s184 + $0x768] sm:$0xff]
        %v457 = vld [vmem:[%s184 + $0x770] sm:$0xff]
        %v458 = vld [vmem:[%s184 + $0x778] sm:$0xff]
        %v459 = vld [vmem:[%s184 + $0x780] sm:$0xff]
        %v460 = vld [vmem:[%s184 + $0x788] sm:$0xff]
        %v461 = vld [vmem:[%s184 + $0x790] sm:$0xff]
        %v462 = vld [vmem:[%s184 + $0x798] sm:$0xff]
        %v463 = vld [vmem:[%s184 + $0x7a0] sm:$0xff]
        %v464 = vld [vmem:[%s184 + $0x7a8] sm:$0xff]
        %v465 = vld [vmem:[%s184 + $0x7b0] sm:$0xff]
        %v466 = vld [vmem:[%s184 + $0x7b8] sm:$0xff]
        %v467 = vld [vmem:[%s184 + $0x7c0] sm:$0xff]
        %v468 = vld [vmem:[%s184 + $0x7c8] sm:$0xff]
        %v469 = vld [vmem:[%s184 + $0x7d0] sm:$0xff]
        %v470 = vld [vmem:[%s184 + $0x7d8] sm:$0xff]
        %v471 = vld [vmem:[%s184 + $0x7e0] sm:$0xff]
        %v472 = vld [vmem:[%s184 + $0x7e8] sm:$0xff]
        %v473 = vld [vmem:[%s184 + $0x7f0] sm:$0xff]
        %v474 = vld [vmem:[%s184 + $0x7f8] sm:$0xff]
        %v475 = vld [vmem:[#allocation5] sm:$0xff]
        %v476 = vld [vmem:[#allocation5 + $0x8] sm:$0xff]
        %v477 = vld [vmem:[#allocation5 + $0x10] sm:$0xff]
        %v478 = vld [vmem:[#allocation5 + $0x18] sm:$0xff]
        %v479 = vld [vmem:[#allocation5 + $0x20] sm:$0xff]
        %v480 = vld [vmem:[#allocation5 + $0x28] sm:$0xff]
        %v481 = vld [vmem:[#allocation5 + $0x30] sm:$0xff]
        %v482 = vld [vmem:[#allocation5 + $0x38] sm:$0xff]
        %v483 = vld [vmem:[#allocation5 + $0x40] sm:$0xff]
        %v484 = vld [vmem:[#allocation5 + $0x48] sm:$0xff]
        %v485 = vld [vmem:[#allocation5 + $0x50] sm:$0xff]
        %v486 = vld [vmem:[#allocation5 + $0x58] sm:$0xff]
        %v487 = vld [vmem:[#allocation5 + $0x60] sm:$0xff]
        %v488 = vld [vmem:[#allocation5 + $0x68] sm:$0xff]
        %v489 = vld [vmem:[#allocation5 + $0x70] sm:$0xff]
        %v490 = vld [vmem:[#allocation5 + $0x78] sm:$0xff]
        %v491 = vld [vmem:[#allocation5 + $0x80] sm:$0xff]
        %v492 = vld [vmem:[#allocation5 + $0x88] sm:$0xff]
        %v493 = vld [vmem:[#allocation5 + $0x90] sm:$0xff]
        %v494 = vld [vmem:[#allocation5 + $0x98] sm:$0xff]
        %v495 = vld [vmem:[#allocation5 + $0xa0] sm:$0xff]
        %v496 = vld [vmem:[#allocation5 + $0xa8] sm:$0xff]
        %v497 = vld [vmem:[#allocation5 + $0xb0] sm:$0xff]
        %v498 = vld [vmem:[#allocation5 + $0xb8] sm:$0xff]
        %v499 = vld [vmem:[#allocation5 + $0xc0] sm:$0xff]
        %v500 = vld [vmem:[#allocation5 + $0xc8] sm:$0xff]
        %v501 = vld [vmem:[#allocation5 + $0xd0] sm:$0xff]
        %v502 = vld [vmem:[#allocation5 + $0xd8] sm:$0xff]
        %v503 = vld [vmem:[#allocation5 + $0xe0] sm:$0xff]
        %v504 = vld [vmem:[#allocation5 + $0xe8] sm:$0xff]
        %v505 = vld [vmem:[#allocation5 + $0xf0] sm:$0xff]
        %v506 = vld [vmem:[#allocation5 + $0xf8] sm:$0xff]
        %v507 = vld [vmem:[#allocation5 + $0x100] sm:$0xff]
        %v508 = vld [vmem:[#allocation5 + $0x108] sm:$0xff]
        %v509 = vld [vmem:[#allocation5 + $0x110] sm:$0xff]
        %v510 = vld [vmem:[#allocation5 + $0x118] sm:$0xff]
        %v511 = vld [vmem:[#allocation5 + $0x120] sm:$0xff]
        %v512 = vld [vmem:[#allocation5 + $0x128] sm:$0xff]
        %v513 = vld [vmem:[#allocation5 + $0x130] sm:$0xff]
        %v514 = vld [vmem:[#allocation5 + $0x138] sm:$0xff]
        %v515 = vld [vmem:[#allocation5 + $0x140] sm:$0xff]
        %v516 = vld [vmem:[#allocation5 + $0x148] sm:$0xff]
        %v517 = vld [vmem:[#allocation5 + $0x150] sm:$0xff]
        %v518 = vld [vmem:[#allocation5 + $0x158] sm:$0xff]
        %v519 = vld [vmem:[#allocation5 + $0x160] sm:$0xff]
        %v520 = vld [vmem:[#allocation5 + $0x168] sm:$0xff]
        %v521 = vld [vmem:[#allocation5 + $0x170] sm:$0xff]
        %v522 = vld [vmem:[#allocation5 + $0x178] sm:$0xff]
        %v523 = vld [vmem:[#allocation5 + $0x180] sm:$0xff]
        %v524 = vld [vmem:[#allocation5 + $0x188] sm:$0xff]
        %v525 = vld [vmem:[#allocation5 + $0x190] sm:$0xff]
        %v526 = vld [vmem:[#allocation5 + $0x198] sm:$0xff]
        %v527 = vld [vmem:[#allocation5 + $0x1a0] sm:$0xff]
        %v528 = vld [vmem:[#allocation5 + $0x1a8] sm:$0xff]
        %v529 = vld [vmem:[#allocation5 + $0x1b0] sm:$0xff]
        %v530 = vld [vmem:[#allocation5 + $0x1b8] sm:$0xff]
        %v531 = vld [vmem:[#allocation5 + $0x1c0] sm:$0xff]
        %v532 = vld [vmem:[#allocation5 + $0x1c8] sm:$0xff]
        %v533 = vld [vmem:[#allocation5 + $0x1d0] sm:$0xff]
        %v534 = vld [vmem:[#allocation5 + $0x1d8] sm:$0xff]
        %v535 = vld [vmem:[#allocation5 + $0x1e0] sm:$0xff]
        %v536 = vld [vmem:[#allocation5 + $0x1e8] sm:$0xff]
        %v537 = vld [vmem:[#allocation5 + $0x1f0] sm:$0xff]
        %v538 = vld [vmem:[#allocation5 + $0x1f8] sm:$0xff]
        %v539 = vld [vmem:[#allocation5 + $0x200] sm:$0xff]
        %v540 = vld [vmem:[#allocation5 + $0x208] sm:$0xff]
        %v541 = vld [vmem:[#allocation5 + $0x210] sm:$0xff]
        %v542 = vld [vmem:[#allocation5 + $0x218] sm:$0xff]
        %v543 = vld [vmem:[#allocation5 + $0x220] sm:$0xff]
        %v544 = vld [vmem:[#allocation5 + $0x228] sm:$0xff]
        %v545 = vld [vmem:[#allocation5 + $0x230] sm:$0xff]
        %v546 = vld [vmem:[#allocation5 + $0x238] sm:$0xff]
        %v547 = vld [vmem:[#allocation5 + $0x240] sm:$0xff]
        %v548 = vld [vmem:[#allocation5 + $0x248] sm:$0xff]
        %v549 = vld [vmem:[#allocation5 + $0x250] sm:$0xff]
        %v550 = vld [vmem:[#allocation5 + $0x258] sm:$0xff]
        %v551 = vld [vmem:[#allocation5 + $0x260] sm:$0xff]
        %v552 = vld [vmem:[#allocation5 + $0x268] sm:$0xff]
        %v553 = vld [vmem:[#allocation5 + $0x270] sm:$0xff]
        %v554 = vld [vmem:[#allocation5 + $0x278] sm:$0xff]
        %v555 = vld [vmem:[#allocation5 + $0x280] sm:$0xff]
        %v556 = vld [vmem:[#allocation5 + $0x288] sm:$0xff]
        %v557 = vld [vmem:[#allocation5 + $0x290] sm:$0xff]
        %v558 = vld [vmem:[#allocation5 + $0x298] sm:$0xff]
        %v559 = vld [vmem:[#allocation5 + $0x2a0] sm:$0xff]
        %v560 = vld [vmem:[#allocation5 + $0x2a8] sm:$0xff]
        %v561 = vld [vmem:[#allocation5 + $0x2b0] sm:$0xff]
        %v562 = vld [vmem:[#allocation5 + $0x2b8] sm:$0xff]
        %v563 = vld [vmem:[#allocation5 + $0x2c0] sm:$0xff]
        %v564 = vld [vmem:[#allocation5 + $0x2c8] sm:$0xff]
        %v565 = vld [vmem:[#allocation5 + $0x2d0] sm:$0xff]
        %v566 = vld [vmem:[#allocation5 + $0x2d8] sm:$0xff]
        %v567 = vld [vmem:[#allocation5 + $0x2e0] sm:$0xff]
        %v568 = vld [vmem:[#allocation5 + $0x2e8] sm:$0xff]
        %v569 = vld [vmem:[#allocation5 + $0x2f0] sm:$0xff]
        %v570 = vld [vmem:[#allocation5 + $0x2f8] sm:$0xff]
        %v571 = vld [vmem:[#allocation5 + $0x300] sm:$0xff]
        %v572 = vld [vmem:[#allocation5 + $0x308] sm:$0xff]
        %v573 = vld [vmem:[#allocation5 + $0x310] sm:$0xff]
        %v574 = vld [vmem:[#allocation5 + $0x318] sm:$0xff]
        %v575 = vld [vmem:[#allocation5 + $0x320] sm:$0xff]
        %v576 = vld [vmem:[#allocation5 + $0x328] sm:$0xff]
        %v577 = vld [vmem:[#allocation5 + $0x330] sm:$0xff]
        %v578 = vld [vmem:[#allocation5 + $0x338] sm:$0xff]
        %v579 = vld [vmem:[#allocation5 + $0x340] sm:$0xff]
        %v580 = vld [vmem:[#allocation5 + $0x348] sm:$0xff]
        %v581 = vld [vmem:[#allocation5 + $0x350] sm:$0xff]
        %v582 = vld [vmem:[#allocation5 + $0x358] sm:$0xff]
        %v583 = vld [vmem:[#allocation5 + $0x360] sm:$0xff]
        %v584 = vld [vmem:[#allocation5 + $0x368] sm:$0xff]
        %v585 = vld [vmem:[#allocation5 + $0x370] sm:$0xff]
        %v586 = vld [vmem:[#allocation5 + $0x378] sm:$0xff]
        %v587 = vld [vmem:[#allocation5 + $0x380] sm:$0xff]
        %v588 = vld [vmem:[#allocation5 + $0x388] sm:$0xff]
        %v589 = vld [vmem:[#allocation5 + $0x390] sm:$0xff]
        %v590 = vld [vmem:[#allocation5 + $0x398] sm:$0xff]
        %v591 = vld [vmem:[#allocation5 + $0x3a0] sm:$0xff]
        %v592 = vld [vmem:[#allocation5 + $0x3a8] sm:$0xff]
        %v593 = vld [vmem:[#allocation5 + $0x3b0] sm:$0xff]
        %v594 = vld [vmem:[#allocation5 + $0x3b8] sm:$0xff]
        %v595 = vld [vmem:[#allocation5 + $0x3c0] sm:$0xff]
        %v596 = vld [vmem:[#allocation5 + $0x3c8] sm:$0xff]
        %v597 = vld [vmem:[#allocation5 + $0x3d0] sm:$0xff]
        %v598 = vld [vmem:[#allocation5 + $0x3d8] sm:$0xff]
        %v599 = vld [vmem:[#allocation5 + $0x3e0] sm:$0xff]
        %v600 = vld [vmem:[#allocation5 + $0x3e8] sm:$0xff]
        %v601 = vld [vmem:[#allocation5 + $0x3f0] sm:$0xff]
        %v602 = vld [vmem:[#allocation5 + $0x3f8] sm:$0xff]
        %v603 = vld [vmem:[#allocation5 + $0x400] sm:$0xff]
        %v604 = vld [vmem:[#allocation5 + $0x408] sm:$0xff]
        %v605 = vld [vmem:[#allocation5 + $0x410] sm:$0xff]
        %v606 = vld [vmem:[#allocation5 + $0x418] sm:$0xff]
        %v607 = vld [vmem:[#allocation5 + $0x420] sm:$0xff]
        %v608 = vld [vmem:[#allocation5 + $0x428] sm:$0xff]
        %v609 = vld [vmem:[#allocation5 + $0x430] sm:$0xff]
        %v610 = vld [vmem:[#allocation5 + $0x438] sm:$0xff]
        %v611 = vld [vmem:[#allocation5 + $0x440] sm:$0xff]
        %v612 = vld [vmem:[#allocation5 + $0x448] sm:$0xff]
        %v613 = vld [vmem:[#allocation5 + $0x450] sm:$0xff]
        %v614 = vld [vmem:[#allocation5 + $0x458] sm:$0xff]
        %v615 = vld [vmem:[#allocation5 + $0x460] sm:$0xff]
        %v616 = vld [vmem:[#allocation5 + $0x468] sm:$0xff]
        %v617 = vld [vmem:[#allocation5 + $0x470] sm:$0xff]
        %v618 = vld [vmem:[#allocation5 + $0x478] sm:$0xff]
        %v619 = vld [vmem:[#allocation5 + $0x480] sm:$0xff]
        %v620 = vld [vmem:[#allocation5 + $0x488] sm:$0xff]
        %v621 = vld [vmem:[#allocation5 + $0x490] sm:$0xff]
        %v622 = vld [vmem:[#allocation5 + $0x498] sm:$0xff]
        %v623 = vld [vmem:[#allocation5 + $0x4a0] sm:$0xff]
        %v624 = vld [vmem:[#allocation5 + $0x4a8] sm:$0xff]
        %v625 = vld [vmem:[#allocation5 + $0x4b0] sm:$0xff]
        %v626 = vld [vmem:[#allocation5 + $0x4b8] sm:$0xff]
        %v627 = vld [vmem:[#allocation5 + $0x4c0] sm:$0xff]
        %v628 = vld [vmem:[#allocation5 + $0x4c8] sm:$0xff]
        %v629 = vld [vmem:[#allocation5 + $0x4d0] sm:$0xff]
        %v630 = vld [vmem:[#allocation5 + $0x4d8] sm:$0xff]
        %v631 = vld [vmem:[#allocation5 + $0x4e0] sm:$0xff]
        %v632 = vld [vmem:[#allocation5 + $0x4e8] sm:$0xff]
        %v633 = vld [vmem:[#allocation5 + $0x4f0] sm:$0xff]
        %v634 = vld [vmem:[#allocation5 + $0x4f8] sm:$0xff]
        %v635 = vld [vmem:[#allocation5 + $0x500] sm:$0xff]
        %v636 = vld [vmem:[#allocation5 + $0x508] sm:$0xff]
        %v637 = vld [vmem:[#allocation5 + $0x510] sm:$0xff]
        %v638 = vld [vmem:[#allocation5 + $0x518] sm:$0xff]
        %v639 = vld [vmem:[#allocation5 + $0x520] sm:$0xff]
        %v640 = vld [vmem:[#allocation5 + $0x528] sm:$0xff]
        %v641 = vld [vmem:[#allocation5 + $0x530] sm:$0xff]
        %v642 = vld [vmem:[#allocation5 + $0x538] sm:$0xff]
        %v643 = vld [vmem:[#allocation5 + $0x540] sm:$0xff]
        %v644 = vld [vmem:[#allocation5 + $0x548] sm:$0xff]
        %v645 = vld [vmem:[#allocation5 + $0x550] sm:$0xff]
        %v646 = vld [vmem:[#allocation5 + $0x558] sm:$0xff]
        %v647 = vld [vmem:[#allocation5 + $0x560] sm:$0xff]
        %v648 = vld [vmem:[#allocation5 + $0x568] sm:$0xff]
        %v649 = vld [vmem:[#allocation5 + $0x570] sm:$0xff]
        %v650 = vld [vmem:[#allocation5 + $0x578] sm:$0xff]
        %v651 = vld [vmem:[#allocation5 + $0x580] sm:$0xff]
        %v652 = vld [vmem:[#allocation5 + $0x588] sm:$0xff]
        %v653 = vld [vmem:[#allocation5 + $0x590] sm:$0xff]
        %v654 = vld [vmem:[#allocation5 + $0x598] sm:$0xff]
        %v655 = vld [vmem:[#allocation5 + $0x5a0] sm:$0xff]
        %v656 = vld [vmem:[#allocation5 + $0x5a8] sm:$0xff]
        %v657 = vld [vmem:[#allocation5 + $0x5b0] sm:$0xff]
        %v658 = vld [vmem:[#allocation5 + $0x5b8] sm:$0xff]
        %v659 = vld [vmem:[#allocation5 + $0x5c0] sm:$0xff]
        %v660 = vld [vmem:[#allocation5 + $0x5c8] sm:$0xff]
        %v661 = vld [vmem:[#allocation5 + $0x5d0] sm:$0xff]
        %v662 = vld [vmem:[#allocation5 + $0x5d8] sm:$0xff]
        %v663 = vld [vmem:[#allocation5 + $0x5e0] sm:$0xff]
        %v664 = vld [vmem:[#allocation5 + $0x5e8] sm:$0xff]
        %v665 = vld [vmem:[#allocation5 + $0x5f0] sm:$0xff]
        %v666 = vld [vmem:[#allocation5 + $0x5f8] sm:$0xff]
        %v667 = vld [vmem:[#allocation5 + $0x600] sm:$0xff]
        %v668 = vld [vmem:[#allocation5 + $0x608] sm:$0xff]
        %v669 = vld [vmem:[#allocation5 + $0x610] sm:$0xff]
        %v670 = vld [vmem:[#allocation5 + $0x618] sm:$0xff]
        %v671 = vld [vmem:[#allocation5 + $0x620] sm:$0xff]
        %v672 = vld [vmem:[#allocation5 + $0x628] sm:$0xff]
        %v673 = vld [vmem:[#allocation5 + $0x630] sm:$0xff]
        %v674 = vld [vmem:[#allocation5 + $0x638] sm:$0xff]
        %v675 = vld [vmem:[#allocation5 + $0x640] sm:$0xff]
        %v676 = vld [vmem:[#allocation5 + $0x648] sm:$0xff]
        %v677 = vld [vmem:[#allocation5 + $0x650] sm:$0xff]
        %v678 = vld [vmem:[#allocation5 + $0x658] sm:$0xff]
        %v679 = vld [vmem:[#allocation5 + $0x660] sm:$0xff]
        %v680 = vld [vmem:[#allocation5 + $0x668] sm:$0xff]
        %v681 = vld [vmem:[#allocation5 + $0x670] sm:$0xff]
        %v682 = vld [vmem:[#allocation5 + $0x678] sm:$0xff]
        %v683 = vld [vmem:[#allocation5 + $0x680] sm:$0xff]
        %v684 = vld [vmem:[#allocation5 + $0x688] sm:$0xff]
        %v685 = vld [vmem:[#allocation5 + $0x690] sm:$0xff]
        %v686 = vld [vmem:[#allocation5 + $0x698] sm:$0xff]
        %v687 = vld [vmem:[#allocation5 + $0x6a0] sm:$0xff]
        %v688 = vld [vmem:[#allocation5 + $0x6a8] sm:$0xff]
        %v689 = vld [vmem:[#allocation5 + $0x6b0] sm:$0xff]
        %v690 = vld [vmem:[#allocation5 + $0x6b8] sm:$0xff]
        %v691 = vld [vmem:[#allocation5 + $0x6c0] sm:$0xff]
        %v692 = vld [vmem:[#allocation5 + $0x6c8] sm:$0xff]
        %v693 = vld [vmem:[#allocation5 + $0x6d0] sm:$0xff]
        %v694 = vld [vmem:[#allocation5 + $0x6d8] sm:$0xff]
        %v695 = vld [vmem:[#allocation5 + $0x6e0] sm:$0xff]
        %v696 = vld [vmem:[#allocation5 + $0x6e8] sm:$0xff]
        %v697 = vld [vmem:[#allocation5 + $0x6f0] sm:$0xff]
        %v698 = vld [vmem:[#allocation5 + $0x6f8] sm:$0xff]
        %v699 = vld [vmem:[#allocation5 + $0x700] sm:$0xff]
        %v700 = vld [vmem:[#allocation5 + $0x708] sm:$0xff]
        %v701 = vld [vmem:[#allocation5 + $0x710] sm:$0xff]
        %v702 = vld [vmem:[#allocation5 + $0x718] sm:$0xff]
        %v703 = vld [vmem:[#allocation5 + $0x720] sm:$0xff]
        %v704 = vld [vmem:[#allocation5 + $0x728] sm:$0xff]
        %v705 = vld [vmem:[#allocation5 + $0x730] sm:$0xff]
        %v706 = vld [vmem:[#allocation5 + $0x738] sm:$0xff]
        %v707 = vld [vmem:[#allocation5 + $0x740] sm:$0xff]
        %v708 = vld [vmem:[#allocation5 + $0x748] sm:$0xff]
        %v709 = vld [vmem:[#allocation5 + $0x750] sm:$0xff]
        %v710 = vld [vmem:[#allocation5 + $0x758] sm:$0xff]
        %v711 = vld [vmem:[#allocation5 + $0x760] sm:$0xff]
        %v712 = vld [vmem:[#allocation5 + $0x768] sm:$0xff]
        %v713 = vld [vmem:[#allocation5 + $0x770] sm:$0xff]
        %v714 = vld [vmem:[#allocation5 + $0x778] sm:$0xff]
        %v715 = vld [vmem:[#allocation5 + $0x780] sm:$0xff]
        %v716 = vld [vmem:[#allocation5 + $0x788] sm:$0xff]
        %v717 = vld [vmem:[#allocation5 + $0x790] sm:$0xff]
        %v718 = vld [vmem:[#allocation5 + $0x798] sm:$0xff]
        %v719 = vld [vmem:[#allocation5 + $0x7a0] sm:$0xff]
        %v720 = vld [vmem:[#allocation5 + $0x7a8] sm:$0xff]
        %v721 = vld [vmem:[#allocation5 + $0x7b0] sm:$0xff]
        %v722 = vld [vmem:[#allocation5 + $0x7b8] sm:$0xff]
        %v723 = vld [vmem:[#allocation5 + $0x7c0] sm:$0xff]
        %v724 = vld [vmem:[#allocation5 + $0x7c8] sm:$0xff]
        %v725 = vld [vmem:[#allocation5 + $0x7d0] sm:$0xff]
        %v726 = vld [vmem:[#allocation5 + $0x7d8] sm:$0xff]
        %v727 = vld [vmem:[#allocation5 + $0x7e0] sm:$0xff]
        %v728 = vld [vmem:[#allocation5 + $0x7e8] sm:$0xff]
        %v729 = vld [vmem:[#allocation5 + $0x7f0] sm:$0xff]
        %v730 = vld [vmem:[#allocation5 + $0x7f8] sm:$0xff]
        %731 = vmatprep.subr.mxu0 %v506
        %732 = vmatpush1.msra.mxu0 %v505
        %733 = vmatprep.subr.mxu0 %v504
        %734 = vmatpush1.msra.mxu0 %v503
        %735 = vmatprep.subr.mxu0 %v502
        %736 = vmatpush1.msra.mxu0 %v501
        %737 = vmatprep.subr.mxu0 %v500
        %738 = vmatpush1.msra.mxu0 %v499
        %739 = vmatprep.subr.mxu0 %v498
        %740 = vmatpush1.msra.mxu0 %v497
        %741 = vmatprep.subr.mxu0 %v496
        %742 = vmatpush1.msra.mxu0 %v495
        %743 = vmatprep.subr.mxu0 %v494
        %744 = vmatpush1.msra.mxu0 %v493
        %745 = vmatprep.subr.mxu0 %v492
        %746 = vmatpush1.msra.mxu0 %v491
        %747 = vmatprep.subr.mxu0 %v490
        %748 = vmatpush1.msra.mxu0 %v489
        %749 = vmatprep.subr.mxu0 %v488
        %750 = vmatpush1.msra.mxu0 %v487
        %751 = vmatprep.subr.mxu0 %v486
        %752 = vmatpush1.msra.mxu0 %v485
        %753 = vmatprep.subr.mxu0 %v484
        %754 = vmatpush1.msra.mxu0 %v483
        %755 = vmatprep.subr.mxu0 %v482
        %756 = vmatpush1.msra.mxu0 %v481
        %757 = vmatprep.subr.mxu0 %v480
        %758 = vmatpush1.msra.mxu0 %v479
        %759 = vmatprep.subr.mxu0 %v478
        %760 = vmatpush1.msra.mxu0 %v477
        %761 = vmatprep.subr.mxu0 %v476
        %762 = vmatpush1.msra.mxu0 %v475
        %763 = vmatprep.subr.mxu0 %v538
        %764 = vmatpush2.msra.mxu0 %v537
        %765 = vmatprep.subr.mxu0 %v536
        %766 = vmatpush2.msra.mxu0 %v535
        %767 = vmatprep.subr.mxu0 %v534
        %768 = vmatpush2.msra.mxu0 %v533
        %769 = vmatprep.subr.mxu0 %v532
        %770 = vmatpush2.msra.mxu0 %v531
        %771 = vmatprep.subr.mxu0 %v530
        %772 = vmatpush2.msra.mxu0 %v529
        %773 = vmatprep.subr.mxu0 %v528
        %774 = vmatpush2.msra.mxu0 %v527
        %775 = vmatprep.subr.mxu0 %v526
        %776 = vmatpush2.msra.mxu0 %v525
        %777 = vmatprep.subr.mxu0 %v524
        %778 = vmatpush2.msra.mxu0 %v523
        %779 = vmatprep.subr.mxu0 %v522
        %780 = vmatpush2.msra.mxu0 %v521
        %781 = vmatprep.subr.mxu0 %v520
        %782 = vmatpush2.msra.mxu0 %v519
        %783 = vmatprep.subr.mxu0 %v518
        %784 = vmatpush2.msra.mxu0 %v517
        %785 = vmatprep.subr.mxu0 %v516
        %786 = vmatpush2.msra.mxu0 %v515
        %787 = vmatprep.subr.mxu0 %v514
        %788 = vmatpush2.msra.mxu0 %v513
        %789 = vmatprep.subr.mxu0 %v512
        %790 = vmatpush2.msra.mxu0 %v511
        %791 = vmatprep.subr.mxu0 %v510
        %792 = vmatpush2.msra.mxu0 %v509
        %793 = vmatprep.subr.mxu0 %v508
        %794 = vmatpush2.msra.mxu0 %v507
        %795 = vmatprep.mubr.f32.mxu0 %v220
        %796 = vmatmul.mubr.f32.gmra.mxu0 %v219
        %v797 = vpop.f32.mrf.mxu0
        %v798 = vadd.f32 0.0, %v797
        %v799 = vpop.f32.mrf.mxu0
        %v800 = vadd.f32 0.0, %v799
        %801 = vmatprep.mubr.f32.mxu0 %v228
        %802 = vmatmul.mubr.f32.gmra.mxu0 %v227
        %v803 = vpop.f32.mrf.mxu0
        %v804 = vadd.f32 0.0, %v803
        %v805 = vpop.f32.mrf.mxu0
        %v806 = vadd.f32 0.0, %v805
        %807 = vmatprep.mubr.f32.mxu0 %v236
        %808 = vmatmul.mubr.f32.gmra.mxu0 %v235
        %v809 = vpop.f32.mrf.mxu0
        %v810 = vadd.f32 0.0, %v809
        %v811 = vpop.f32.mrf.mxu0
        %v812 = vadd.f32 0.0, %v811
        %813 = vmatprep.mubr.f32.mxu0 %v244
        %814 = vmatmul.mubr.f32.gmra.mxu0 %v243
        %v815 = vpop.f32.mrf.mxu0
        %v816 = vadd.f32 0.0, %v815
        %v817 = vpop.f32.mrf.mxu0
        %v818 = vadd.f32 0.0, %v817
        %819 = vmatprep.mubr.f32.mxu0 %v252
        %820 = vmatmul.mubr.f32.gmra.mxu0 %v251
        %v821 = vpop.f32.mrf.mxu0
        %v822 = vadd.f32 0.0, %v821
        %v823 = vpop.f32.mrf.mxu0
        %v824 = vadd.f32 0.0, %v823
        %825 = vmatprep.mubr.f32.mxu0 %v260
        %826 = vmatmul.mubr.f32.gmra.mxu0 %v259
        %v827 = vpop.f32.mrf.mxu0
        %v828 = vadd.f32 0.0, %v827
        %v829 = vpop.f32.mrf.mxu0
        %v830 = vadd.f32 0.0, %v829
        %831 = vmatprep.mubr.f32.mxu0 %v268
        %832 = vmatmul.mubr.f32.gmra.mxu0 %v267
        %v833 = vpop.f32.mrf.mxu0
        %v834 = vadd.f32 0.0, %v833
        %v835 = vpop.f32.mrf.mxu0
        %v836 = vadd.f32 0.0, %v835
        %837 = vmatprep.mubr.f32.mxu0 %v276
        %838 = vmatmul.mubr.f32.gmra.mxu0 %v275
        %v839 = vpop.f32.mrf.mxu0
        %v840 = vadd.f32 0.0, %v839
        %v841 = vpop.f32.mrf.mxu0
        %v842 = vadd.f32 0.0, %v841
        %843 = vmatprep.mubr.f32.mxu0 %v284
        %844 = vmatmul.mubr.f32.gmra.mxu0 %v283
        %v845 = vpop.f32.mrf.mxu0
        %v846 = vadd.f32 0.0, %v845
        %v847 = vpop.f32.mrf.mxu0
        %v848 = vadd.f32 0.0, %v847
        %849 = vmatprep.mubr.f32.mxu0 %v292
        %850 = vmatmul.mubr.f32.gmra.mxu0 %v291
        %v851 = vpop.f32.mrf.mxu0
        %v852 = vadd.f32 0.0, %v851
        %v853 = vpop.f32.mrf.mxu0
        %v854 = vadd.f32 0.0, %v853
        %855 = vmatprep.mubr.f32.mxu0 %v300
        %856 = vmatmul.mubr.f32.gmra.mxu0 %v299
        %v857 = vpop.f32.mrf.mxu0
        %v858 = vadd.f32 0.0, %v857
        %v859 = vpop.f32.mrf.mxu0
        %v860 = vadd.f32 0.0, %v859
        %861 = vmatprep.mubr.f32.mxu0 %v308
        %862 = vmatmul.mubr.f32.gmra.mxu0 %v307
        %v863 = vpop.f32.mrf.mxu0
        %v864 = vadd.f32 0.0, %v863
        %v865 = vpop.f32.mrf.mxu0
        %v866 = vadd.f32 0.0, %v865
        %867 = vmatprep.mubr.f32.mxu0 %v316
        %868 = vmatmul.mubr.f32.gmra.mxu0 %v315
        %v869 = vpop.f32.mrf.mxu0
        %v870 = vadd.f32 0.0, %v869
        %v871 = vpop.f32.mrf.mxu0
        %v872 = vadd.f32 0.0, %v871
        %873 = vmatprep.mubr.f32.mxu0 %v324
        %874 = vmatmul.mubr.f32.gmra.mxu0 %v323
        %v875 = vpop.f32.mrf.mxu0
        %v876 = vadd.f32 0.0, %v875
        %v877 = vpop.f32.mrf.mxu0
        %v878 = vadd.f32 0.0, %v877
        %879 = vmatprep.mubr.f32.mxu0 %v332
        %880 = vmatmul.mubr.f32.gmra.mxu0 %v331
        %v881 = vpop.f32.mrf.mxu0
        %v882 = vadd.f32 0.0, %v881
        %v883 = vpop.f32.mrf.mxu0
        %v884 = vadd.f32 0.0, %v883
        %885 = vmatprep.mubr.f32.mxu0 %v340
        %886 = vmatmul.mubr.f32.gmra.mxu0 %v339
        %v887 = vpop.f32.mrf.mxu0
        %v888 = vadd.f32 0.0, %v887
        %v889 = vpop.f32.mrf.mxu0
        %v890 = vadd.f32 0.0, %v889
        %891 = vmatprep.mubr.f32.mxu0 %v348
        %892 = vmatmul.mubr.f32.gmra.mxu0 %v347
        %v893 = vpop.f32.mrf.mxu0
        %v894 = vadd.f32 0.0, %v893
        %v895 = vpop.f32.mrf.mxu0
        %v896 = vadd.f32 0.0, %v895
        %897 = vmatprep.mubr.f32.mxu0 %v356
        %898 = vmatmul.mubr.f32.gmra.mxu0 %v355
        %v899 = vpop.f32.mrf.mxu0
        %v900 = vadd.f32 0.0, %v899
        %v901 = vpop.f32.mrf.mxu0
        %v902 = vadd.f32 0.0, %v901
        %903 = vmatprep.mubr.f32.mxu0 %v364
        %904 = vmatmul.mubr.f32.gmra.mxu0 %v363
        %v905 = vpop.f32.mrf.mxu0
        %v906 = vadd.f32 0.0, %v905
        %v907 = vpop.f32.mrf.mxu0
        %v908 = vadd.f32 0.0, %v907
        %909 = vmatprep.mubr.f32.mxu0 %v372
        %910 = vmatmul.mubr.f32.gmra.mxu0 %v371
        %v911 = vpop.f32.mrf.mxu0
        %v912 = vadd.f32 0.0, %v911
        %v913 = vpop.f32.mrf.mxu0
        %v914 = vadd.f32 0.0, %v913
        %915 = vmatprep.mubr.f32.mxu0 %v380
        %916 = vmatmul.mubr.f32.gmra.mxu0 %v379
        %v917 = vpop.f32.mrf.mxu0
        %v918 = vadd.f32 0.0, %v917
        %v919 = vpop.f32.mrf.mxu0
        %v920 = vadd.f32 0.0, %v919
        %921 = vmatprep.mubr.f32.mxu0 %v388
        %922 = vmatmul.mubr.f32.gmra.mxu0 %v387
        %v923 = vpop.f32.mrf.mxu0
        %v924 = vadd.f32 0.0, %v923
        %v925 = vpop.f32.mrf.mxu0
        %v926 = vadd.f32 0.0, %v925
        %927 = vmatprep.mubr.f32.mxu0 %v396
        %928 = vmatmul.mubr.f32.gmra.mxu0 %v395
        %v929 = vpop.f32.mrf.mxu0
        %v930 = vadd.f32 0.0, %v929
        %v931 = vpop.f32.mrf.mxu0
        %v932 = vadd.f32 0.0, %v931
        %933 = vmatprep.mubr.f32.mxu0 %v404
        %934 = vmatmul.mubr.f32.gmra.mxu0 %v403
        %v935 = vpop.f32.mrf.mxu0
        %v936 = vadd.f32 0.0, %v935
        %v937 = vpop.f32.mrf.mxu0
        %v938 = vadd.f32 0.0, %v937
        %939 = vmatprep.mubr.f32.mxu0 %v412
        %940 = vmatmul.mubr.f32.gmra.mxu0 %v411
        %v941 = vpop.f32.mrf.mxu0
        %v942 = vadd.f32 0.0, %v941
        %v943 = vpop.f32.mrf.mxu0
        %v944 = vadd.f32 0.0, %v943
        %945 = vmatprep.mubr.f32.mxu0 %v420
        %946 = vmatmul.mubr.f32.gmra.mxu0 %v419
        %v947 = vpop.f32.mrf.mxu0
        %v948 = vadd.f32 0.0, %v947
        %v949 = vpop.f32.mrf.mxu0
        %v950 = vadd.f32 0.0, %v949
        %951 = vmatprep.mubr.f32.mxu0 %v428
        %952 = vmatmul.mubr.f32.gmra.mxu0 %v427
        %v953 = vpop.f32.mrf.mxu0
        %v954 = vadd.f32 0.0, %v953
        %v955 = vpop.f32.mrf.mxu0
        %v956 = vadd.f32 0.0, %v955
        %957 = vmatprep.mubr.f32.mxu0 %v436
        %958 = vmatmul.mubr.f32.gmra.mxu0 %v435
        %v959 = vpop.f32.mrf.mxu0
        %v960 = vadd.f32 0.0, %v959
        %v961 = vpop.f32.mrf.mxu0
        %v962 = vadd.f32 0.0, %v961
        %963 = vmatprep.mubr.f32.mxu0 %v444
        %964 = vmatmul.mubr.f32.gmra.mxu0 %v443
        %v965 = vpop.f32.mrf.mxu0
        %v966 = vadd.f32 0.0, %v965
        %v967 = vpop.f32.mrf.mxu0
        %v968 = vadd.f32 0.0, %v967
        %969 = vmatprep.mubr.f32.mxu0 %v452
        %970 = vmatmul.mubr.f32.gmra.mxu0 %v451
        %v971 = vpop.f32.mrf.mxu0
        %v972 = vadd.f32 0.0, %v971
        %v973 = vpop.f32.mrf.mxu0
        %v974 = vadd.f32 0.0, %v973
        %975 = vmatprep.mubr.f32.mxu0 %v460
        %976 = vmatmul.mubr.f32.gmra.mxu0 %v459
        %v977 = vpop.f32.mrf.mxu0
        %v978 = vadd.f32 0.0, %v977
        %v979 = vpop.f32.mrf.mxu0
        %v980 = vadd.f32 0.0, %v979
        %981 = vmatprep.mubr.f32.mxu0 %v468
        %982 = vmatmul.mubr.f32.gmra.mxu0 %v467
        %v983 = vpop.f32.mrf.mxu0
        %v984 = vadd.f32 0.0, %v983
        %v985 = vpop.f32.mrf.mxu0
        %v986 = vadd.f32 0.0, %v985
        %987 = vdwg.mxu0
        %988 = vmatprep.subr.mxu0 %v570
        %989 = vmatpush1.msra.mxu0 %v569
        %990 = vmatprep.subr.mxu0 %v568
        %991 = vmatpush1.msra.mxu0 %v567
        %992 = vmatprep.subr.mxu0 %v566
        %993 = vmatpush1.msra.mxu0 %v565
        %994 = vmatprep.subr.mxu0 %v564
        %995 = vmatpush1.msra.mxu0 %v563
        %996 = vmatprep.subr.mxu0 %v562
        %997 = vmatpush1.msra.mxu0 %v561
        %998 = vmatprep.subr.mxu0 %v560
        %999 = vmatpush1.msra.mxu0 %v559
        %1000 = vmatprep.subr.mxu0 %v558
        %1001 = vmatpush1.msra.mxu0 %v557
        %1002 = vmatprep.subr.mxu0 %v556
        %1003 = vmatpush1.msra.mxu0 %v555
        %1004 = vmatprep.subr.mxu0 %v554
        %1005 = vmatpush1.msra.mxu0 %v553
        %1006 = vmatprep.subr.mxu0 %v552
        %1007 = vmatpush1.msra.mxu0 %v551
        %1008 = vmatprep.subr.mxu0 %v550
        %1009 = vmatpush1.msra.mxu0 %v549
        %1010 = vmatprep.subr.mxu0 %v548
        %1011 = vmatpush1.msra.mxu0 %v547
        %1012 = vmatprep.subr.mxu0 %v546
        %1013 = vmatpush1.msra.mxu0 %v545
        %1014 = vmatprep.subr.mxu0 %v544
        %1015 = vmatpush1.msra.mxu0 %v543
        %1016 = vmatprep.subr.mxu0 %v542
        %1017 = vmatpush1.msra.mxu0 %v541
        %1018 = vmatprep.subr.mxu0 %v540
        %1019 = vmatpush1.msra.mxu0 %v539
        %1020 = vmatprep.subr.mxu0 %v602
        %1021 = vmatpush2.msra.mxu0 %v601
        %1022 = vmatprep.subr.mxu0 %v600
        %1023 = vmatpush2.msra.mxu0 %v599
        %1024 = vmatprep.subr.mxu0 %v598
        %1025 = vmatpush2.msra.mxu0 %v597
        %1026 = vmatprep.subr.mxu0 %v596
        %1027 = vmatpush2.msra.mxu0 %v595
        %1028 = vmatprep.subr.mxu0 %v594
        %1029 = vmatpush2.msra.mxu0 %v593
        %1030 = vmatprep.subr.mxu0 %v592
        %1031 = vmatpush2.msra.mxu0 %v591
        %1032 = vmatprep.subr.mxu0 %v590
        %1033 = vmatpush2.msra.mxu0 %v589
        %1034 = vmatprep.subr.mxu0 %v588
        %1035 = vmatpush2.msra.mxu0 %v587
        %1036 = vmatprep.subr.mxu0 %v586
        %1037 = vmatpush2.msra.mxu0 %v585
        %1038 = vmatprep.subr.mxu0 %v584
        %1039 = vmatpush2.msra.mxu0 %v583
        %1040 = vmatprep.subr.mxu0 %v582
        %1041 = vmatpush2.msra.mxu0 %v581
        %1042 = vmatprep.subr.mxu0 %v580
        %1043 = vmatpush2.msra.mxu0 %v579
        %1044 = vmatprep.subr.mxu0 %v578
        %1045 = vmatpush2.msra.mxu0 %v577
        %1046 = vmatprep.subr.mxu0 %v576
        %1047 = vmatpush2.msra.mxu0 %v575
        %1048 = vmatprep.subr.mxu0 %v574
        %1049 = vmatpush2.msra.mxu0 %v573
        %1050 = vmatprep.subr.mxu0 %v572
        %1051 = vmatpush2.msra.mxu0 %v571
        %1052 = vmatprep.mubr.f32.mxu0 %v222
        %1053 = vmatmul.mubr.f32.gmra.mxu0 %v221
        %v1054 = vpop.f32.mrf.mxu0
        %v1055 = vadd.f32 %v798, %v1054
        %v1056 = vpop.f32.mrf.mxu0
        %v1057 = vadd.f32 %v800, %v1056
        %1058 = vmatprep.mubr.f32.mxu0 %v230
        %1059 = vmatmul.mubr.f32.gmra.mxu0 %v229
        %v1060 = vpop.f32.mrf.mxu0
        %v1061 = vadd.f32 %v804, %v1060
        %v1062 = vpop.f32.mrf.mxu0
        %v1063 = vadd.f32 %v806, %v1062
        %1064 = vmatprep.mubr.f32.mxu0 %v238
        %1065 = vmatmul.mubr.f32.gmra.mxu0 %v237
        %v1066 = vpop.f32.mrf.mxu0
        %v1067 = vadd.f32 %v810, %v1066
        %v1068 = vpop.f32.mrf.mxu0
        %v1069 = vadd.f32 %v812, %v1068
        %1070 = vmatprep.mubr.f32.mxu0 %v246
        %1071 = vmatmul.mubr.f32.gmra.mxu0 %v245
        %v1072 = vpop.f32.mrf.mxu0
        %v1073 = vadd.f32 %v816, %v1072
        %v1074 = vpop.f32.mrf.mxu0
        %v1075 = vadd.f32 %v818, %v1074
        %1076 = vmatprep.mubr.f32.mxu0 %v254
        %1077 = vmatmul.mubr.f32.gmra.mxu0 %v253
        %v1078 = vpop.f32.mrf.mxu0
        %v1079 = vadd.f32 %v822, %v1078
        %v1080 = vpop.f32.mrf.mxu0
        %v1081 = vadd.f32 %v824, %v1080
        %1082 = vmatprep.mubr.f32.mxu0 %v262
        %1083 = vmatmul.mubr.f32.gmra.mxu0 %v261
        %v1084 = vpop.f32.mrf.mxu0
        %v1085 = vadd.f32 %v828, %v1084
        %v1086 = vpop.f32.mrf.mxu0
        %v1087 = vadd.f32 %v830, %v1086
        %1088 = vmatprep.mubr.f32.mxu0 %v270
        %1089 = vmatmul.mubr.f32.gmra.mxu0 %v269
        %v1090 = vpop.f32.mrf.mxu0
        %v1091 = vadd.f32 %v834, %v1090
        %v1092 = vpop.f32.mrf.mxu0
        %v1093 = vadd.f32 %v836, %v1092
        %1094 = vmatprep.mubr.f32.mxu0 %v278
        %1095 = vmatmul.mubr.f32.gmra.mxu0 %v277
        %v1096 = vpop.f32.mrf.mxu0
        %v1097 = vadd.f32 %v840, %v1096
        %v1098 = vpop.f32.mrf.mxu0
        %v1099 = vadd.f32 %v842, %v1098
        %1100 = vmatprep.mubr.f32.mxu0 %v286
        %1101 = vmatmul.mubr.f32.gmra.mxu0 %v285
        %v1102 = vpop.f32.mrf.mxu0
        %v1103 = vadd.f32 %v846, %v1102
        %v1104 = vpop.f32.mrf.mxu0
        %v1105 = vadd.f32 %v848, %v1104
        %1106 = vmatprep.mubr.f32.mxu0 %v294
        %1107 = vmatmul.mubr.f32.gmra.mxu0 %v293
        %v1108 = vpop.f32.mrf.mxu0
        %v1109 = vadd.f32 %v852, %v1108
        %v1110 = vpop.f32.mrf.mxu0
        %v1111 = vadd.f32 %v854, %v1110
        %1112 = vmatprep.mubr.f32.mxu0 %v302
        %1113 = vmatmul.mubr.f32.gmra.mxu0 %v301
        %v1114 = vpop.f32.mrf.mxu0
        %v1115 = vadd.f32 %v858, %v1114
        %v1116 = vpop.f32.mrf.mxu0
        %v1117 = vadd.f32 %v860, %v1116
        %1118 = vmatprep.mubr.f32.mxu0 %v310
        %1119 = vmatmul.mubr.f32.gmra.mxu0 %v309
        %v1120 = vpop.f32.mrf.mxu0
        %v1121 = vadd.f32 %v864, %v1120
        %v1122 = vpop.f32.mrf.mxu0
        %v1123 = vadd.f32 %v866, %v1122
        %1124 = vmatprep.mubr.f32.mxu0 %v318
        %1125 = vmatmul.mubr.f32.gmra.mxu0 %v317
        %v1126 = vpop.f32.mrf.mxu0
        %v1127 = vadd.f32 %v870, %v1126
        %v1128 = vpop.f32.mrf.mxu0
        %v1129 = vadd.f32 %v872, %v1128
        %1130 = vmatprep.mubr.f32.mxu0 %v326
        %1131 = vmatmul.mubr.f32.gmra.mxu0 %v325
        %v1132 = vpop.f32.mrf.mxu0
        %v1133 = vadd.f32 %v876, %v1132
        %v1134 = vpop.f32.mrf.mxu0
        %v1135 = vadd.f32 %v878, %v1134
        %1136 = vmatprep.mubr.f32.mxu0 %v334
        %1137 = vmatmul.mubr.f32.gmra.mxu0 %v333
        %v1138 = vpop.f32.mrf.mxu0
        %v1139 = vadd.f32 %v882, %v1138
        %v1140 = vpop.f32.mrf.mxu0
        %v1141 = vadd.f32 %v884, %v1140
        %1142 = vmatprep.mubr.f32.mxu0 %v342
        %1143 = vmatmul.mubr.f32.gmra.mxu0 %v341
        %v1144 = vpop.f32.mrf.mxu0
        %v1145 = vadd.f32 %v888, %v1144
        %v1146 = vpop.f32.mrf.mxu0
        %v1147 = vadd.f32 %v890, %v1146
        %1148 = vmatprep.mubr.f32.mxu0 %v350
        %1149 = vmatmul.mubr.f32.gmra.mxu0 %v349
        %v1150 = vpop.f32.mrf.mxu0
        %v1151 = vadd.f32 %v894, %v1150
        %v1152 = vpop.f32.mrf.mxu0
        %v1153 = vadd.f32 %v896, %v1152
        %1154 = vmatprep.mubr.f32.mxu0 %v358
        %1155 = vmatmul.mubr.f32.gmra.mxu0 %v357
        %v1156 = vpop.f32.mrf.mxu0
        %v1157 = vadd.f32 %v900, %v1156
        %v1158 = vpop.f32.mrf.mxu0
        %v1159 = vadd.f32 %v902, %v1158
        %1160 = vmatprep.mubr.f32.mxu0 %v366
        %1161 = vmatmul.mubr.f32.gmra.mxu0 %v365
        %v1162 = vpop.f32.mrf.mxu0
        %v1163 = vadd.f32 %v906, %v1162
        %v1164 = vpop.f32.mrf.mxu0
        %v1165 = vadd.f32 %v908, %v1164
        %1166 = vmatprep.mubr.f32.mxu0 %v374
        %1167 = vmatmul.mubr.f32.gmra.mxu0 %v373
        %v1168 = vpop.f32.mrf.mxu0
        %v1169 = vadd.f32 %v912, %v1168
        %v1170 = vpop.f32.mrf.mxu0
        %v1171 = vadd.f32 %v914, %v1170
        %1172 = vmatprep.mubr.f32.mxu0 %v382
        %1173 = vmatmul.mubr.f32.gmra.mxu0 %v381
        %v1174 = vpop.f32.mrf.mxu0
        %v1175 = vadd.f32 %v918, %v1174
        %v1176 = vpop.f32.mrf.mxu0
        %v1177 = vadd.f32 %v920, %v1176
        %1178 = vmatprep.mubr.f32.mxu0 %v390
        %1179 = vmatmul.mubr.f32.gmra.mxu0 %v389
        %v1180 = vpop.f32.mrf.mxu0
        %v1181 = vadd.f32 %v924, %v1180
        %v1182 = vpop.f32.mrf.mxu0
        %v1183 = vadd.f32 %v926, %v1182
        %1184 = vmatprep.mubr.f32.mxu0 %v398
        %1185 = vmatmul.mubr.f32.gmra.mxu0 %v397
        %v1186 = vpop.f32.mrf.mxu0
        %v1187 = vadd.f32 %v930, %v1186
        %v1188 = vpop.f32.mrf.mxu0
        %v1189 = vadd.f32 %v932, %v1188
        %1190 = vmatprep.mubr.f32.mxu0 %v406
        %1191 = vmatmul.mubr.f32.gmra.mxu0 %v405
        %v1192 = vpop.f32.mrf.mxu0
        %v1193 = vadd.f32 %v936, %v1192
        %v1194 = vpop.f32.mrf.mxu0
        %v1195 = vadd.f32 %v938, %v1194
        %1196 = vmatprep.mubr.f32.mxu0 %v414
        %1197 = vmatmul.mubr.f32.gmra.mxu0 %v413
        %v1198 = vpop.f32.mrf.mxu0
        %v1199 = vadd.f32 %v942, %v1198
        %v1200 = vpop.f32.mrf.mxu0
        %v1201 = vadd.f32 %v944, %v1200
        %1202 = vmatprep.mubr.f32.mxu0 %v422
        %1203 = vmatmul.mubr.f32.gmra.mxu0 %v421
        %v1204 = vpop.f32.mrf.mxu0
        %v1205 = vadd.f32 %v948, %v1204
        %v1206 = vpop.f32.mrf.mxu0
        %v1207 = vadd.f32 %v950, %v1206
        %1208 = vmatprep.mubr.f32.mxu0 %v430
        %1209 = vmatmul.mubr.f32.gmra.mxu0 %v429
        %v1210 = vpop.f32.mrf.mxu0
        %v1211 = vadd.f32 %v954, %v1210
        %v1212 = vpop.f32.mrf.mxu0
        %v1213 = vadd.f32 %v956, %v1212
        %1214 = vmatprep.mubr.f32.mxu0 %v438
        %1215 = vmatmul.mubr.f32.gmra.mxu0 %v437
        %v1216 = vpop.f32.mrf.mxu0
        %v1217 = vadd.f32 %v960, %v1216
        %v1218 = vpop.f32.mrf.mxu0
        %v1219 = vadd.f32 %v962, %v1218
        %1220 = vmatprep.mubr.f32.mxu0 %v446
        %1221 = vmatmul.mubr.f32.gmra.mxu0 %v445
        %v1222 = vpop.f32.mrf.mxu0
        %v1223 = vadd.f32 %v966, %v1222
        %v1224 = vpop.f32.mrf.mxu0
        %v1225 = vadd.f32 %v968, %v1224
        %1226 = vmatprep.mubr.f32.mxu0 %v454
        %1227 = vmatmul.mubr.f32.gmra.mxu0 %v453
        %v1228 = vpop.f32.mrf.mxu0
        %v1229 = vadd.f32 %v972, %v1228
        %v1230 = vpop.f32.mrf.mxu0
        %v1231 = vadd.f32 %v974, %v1230
        %1232 = vmatprep.mubr.f32.mxu0 %v462
        %1233 = vmatmul.mubr.f32.gmra.mxu0 %v461
        %v1234 = vpop.f32.mrf.mxu0
        %v1235 = vadd.f32 %v978, %v1234
        %v1236 = vpop.f32.mrf.mxu0
        %v1237 = vadd.f32 %v980, %v1236
        %1238 = vmatprep.mubr.f32.mxu0 %v470
        %1239 = vmatmul.mubr.f32.gmra.mxu0 %v469
        %v1240 = vpop.f32.mrf.mxu0
        %v1241 = vadd.f32 %v984, %v1240
        %v1242 = vpop.f32.mrf.mxu0
        %v1243 = vadd.f32 %v986, %v1242
        %1244 = vdwg.mxu0
        %1245 = vmatprep.subr.mxu0 %v634
        %1246 = vmatpush1.msra.mxu0 %v633
        %1247 = vmatprep.subr.mxu0 %v632
        %1248 = vmatpush1.msra.mxu0 %v631
        %1249 = vmatprep.subr.mxu0 %v630
        %1250 = vmatpush1.msra.mxu0 %v629
        %1251 = vmatprep.subr.mxu0 %v628
        %1252 = vmatpush1.msra.mxu0 %v627
        %1253 = vmatprep.subr.mxu0 %v626
        %1254 = vmatpush1.msra.mxu0 %v625
        %1255 = vmatprep.subr.mxu0 %v624
        %1256 = vmatpush1.msra.mxu0 %v623
        %1257 = vmatprep.subr.mxu0 %v622
        %1258 = vmatpush1.msra.mxu0 %v621
        %1259 = vmatprep.subr.mxu0 %v620
        %1260 = vmatpush1.msra.mxu0 %v619
        %1261 = vmatprep.subr.mxu0 %v618
        %1262 = vmatpush1.msra.mxu0 %v617
        %1263 = vmatprep.subr.mxu0 %v616
        %1264 = vmatpush1.msra.mxu0 %v615
        %1265 = vmatprep.subr.mxu0 %v614
        %1266 = vmatpush1.msra.mxu0 %v613
        %1267 = vmatprep.subr.mxu0 %v612
        %1268 = vmatpush1.msra.mxu0 %v611
        %1269 = vmatprep.subr.mxu0 %v610
        %1270 = vmatpush1.msra.mxu0 %v609
        %1271 = vmatprep.subr.mxu0 %v608
        %1272 = vmatpush1.msra.mxu0 %v607
        %1273 = vmatprep.subr.mxu0 %v606
        %1274 = vmatpush1.msra.mxu0 %v605
        %1275 = vmatprep.subr.mxu0 %v604
        %1276 = vmatpush1.msra.mxu0 %v603
        %1277 = vmatprep.subr.mxu0 %v666
        %1278 = vmatpush2.msra.mxu0 %v665
        %1279 = vmatprep.subr.mxu0 %v664
        %1280 = vmatpush2.msra.mxu0 %v663
        %1281 = vmatprep.subr.mxu0 %v662
        %1282 = vmatpush2.msra.mxu0 %v661
        %1283 = vmatprep.subr.mxu0 %v660
        %1284 = vmatpush2.msra.mxu0 %v659
        %1285 = vmatprep.subr.mxu0 %v658
        %1286 = vmatpush2.msra.mxu0 %v657
        %1287 = vmatprep.subr.mxu0 %v656
        %1288 = vmatpush2.msra.mxu0 %v655
        %1289 = vmatprep.subr.mxu0 %v654
        %1290 = vmatpush2.msra.mxu0 %v653
        %1291 = vmatprep.subr.mxu0 %v652
        %1292 = vmatpush2.msra.mxu0 %v651
        %1293 = vmatprep.subr.mxu0 %v650
        %1294 = vmatpush2.msra.mxu0 %v649
        %1295 = vmatprep.subr.mxu0 %v648
        %1296 = vmatpush2.msra.mxu0 %v647
        %1297 = vmatprep.subr.mxu0 %v646
        %1298 = vmatpush2.msra.mxu0 %v645
        %1299 = vmatprep.subr.mxu0 %v644
        %1300 = vmatpush2.msra.mxu0 %v643
        %1301 = vmatprep.subr.mxu0 %v642
        %1302 = vmatpush2.msra.mxu0 %v641
        %1303 = vmatprep.subr.mxu0 %v640
        %1304 = vmatpush2.msra.mxu0 %v639
        %1305 = vmatprep.subr.mxu0 %v638
        %1306 = vmatpush2.msra.mxu0 %v637
        %1307 = vmatprep.subr.mxu0 %v636
        %1308 = vmatpush2.msra.mxu0 %v635
        %1309 = vmatprep.mubr.f32.mxu0 %v224
        %1310 = vmatmul.mubr.f32.gmra.mxu0 %v223
        %v1311 = vpop.f32.mrf.mxu0
        %v1312 = vadd.f32 %v1055, %v1311
        %v1313 = vpop.f32.mrf.mxu0
        %v1314 = vadd.f32 %v1057, %v1313
        %1315 = vmatprep.mubr.f32.mxu0 %v232
        %1316 = vmatmul.mubr.f32.gmra.mxu0 %v231
        %v1317 = vpop.f32.mrf.mxu0
        %v1318 = vadd.f32 %v1061, %v1317
        %v1319 = vpop.f32.mrf.mxu0
        %v1320 = vadd.f32 %v1063, %v1319
        %1321 = vmatprep.mubr.f32.mxu0 %v240
        %1322 = vmatmul.mubr.f32.gmra.mxu0 %v239
        %v1323 = vpop.f32.mrf.mxu0
        %v1324 = vadd.f32 %v1067, %v1323
        %v1325 = vpop.f32.mrf.mxu0
        %v1326 = vadd.f32 %v1069, %v1325
        %1327 = vmatprep.mubr.f32.mxu0 %v248
        %1328 = vmatmul.mubr.f32.gmra.mxu0 %v247
        %v1329 = vpop.f32.mrf.mxu0
        %v1330 = vadd.f32 %v1073, %v1329
        %v1331 = vpop.f32.mrf.mxu0
        %v1332 = vadd.f32 %v1075, %v1331
        %1333 = vmatprep.mubr.f32.mxu0 %v256
        %1334 = vmatmul.mubr.f32.gmra.mxu0 %v255
        %v1335 = vpop.f32.mrf.mxu0
        %v1336 = vadd.f32 %v1079, %v1335
        %v1337 = vpop.f32.mrf.mxu0
        %v1338 = vadd.f32 %v1081, %v1337
        %1339 = vmatprep.mubr.f32.mxu0 %v264
        %1340 = vmatmul.mubr.f32.gmra.mxu0 %v263
        %v1341 = vpop.f32.mrf.mxu0
        %v1342 = vadd.f32 %v1085, %v1341
        %v1343 = vpop.f32.mrf.mxu0
        %v1344 = vadd.f32 %v1087, %v1343
        %1345 = vmatprep.mubr.f32.mxu0 %v272
        %1346 = vmatmul.mubr.f32.gmra.mxu0 %v271
        %v1347 = vpop.f32.mrf.mxu0
        %v1348 = vadd.f32 %v1091, %v1347
        %v1349 = vpop.f32.mrf.mxu0
        %v1350 = vadd.f32 %v1093, %v1349
        %1351 = vmatprep.mubr.f32.mxu0 %v280
        %1352 = vmatmul.mubr.f32.gmra.mxu0 %v279
        %v1353 = vpop.f32.mrf.mxu0
        %v1354 = vadd.f32 %v1097, %v1353
        %v1355 = vpop.f32.mrf.mxu0
        %v1356 = vadd.f32 %v1099, %v1355
        %1357 = vmatprep.mubr.f32.mxu0 %v288
        %1358 = vmatmul.mubr.f32.gmra.mxu0 %v287
        %v1359 = vpop.f32.mrf.mxu0
        %v1360 = vadd.f32 %v1103, %v1359
        %v1361 = vpop.f32.mrf.mxu0
        %v1362 = vadd.f32 %v1105, %v1361
        %1363 = vmatprep.mubr.f32.mxu0 %v296
        %1364 = vmatmul.mubr.f32.gmra.mxu0 %v295
        %v1365 = vpop.f32.mrf.mxu0
        %v1366 = vadd.f32 %v1109, %v1365
        %v1367 = vpop.f32.mrf.mxu0
        %v1368 = vadd.f32 %v1111, %v1367
        %1369 = vmatprep.mubr.f32.mxu0 %v304
        %1370 = vmatmul.mubr.f32.gmra.mxu0 %v303
        %v1371 = vpop.f32.mrf.mxu0
        %v1372 = vadd.f32 %v1115, %v1371
        %v1373 = vpop.f32.mrf.mxu0
        %v1374 = vadd.f32 %v1117, %v1373
        %1375 = vmatprep.mubr.f32.mxu0 %v312
        %1376 = vmatmul.mubr.f32.gmra.mxu0 %v311
        %v1377 = vpop.f32.mrf.mxu0
        %v1378 = vadd.f32 %v1121, %v1377
        %v1379 = vpop.f32.mrf.mxu0
        %v1380 = vadd.f32 %v1123, %v1379
        %1381 = vmatprep.mubr.f32.mxu0 %v320
        %1382 = vmatmul.mubr.f32.gmra.mxu0 %v319
        %v1383 = vpop.f32.mrf.mxu0
        %v1384 = vadd.f32 %v1127, %v1383
        %v1385 = vpop.f32.mrf.mxu0
        %v1386 = vadd.f32 %v1129, %v1385
        %1387 = vmatprep.mubr.f32.mxu0 %v328
        %1388 = vmatmul.mubr.f32.gmra.mxu0 %v327
        %v1389 = vpop.f32.mrf.mxu0
        %v1390 = vadd.f32 %v1133, %v1389
        %v1391 = vpop.f32.mrf.mxu0
        %v1392 = vadd.f32 %v1135, %v1391
        %1393 = vmatprep.mubr.f32.mxu0 %v336
        %1394 = vmatmul.mubr.f32.gmra.mxu0 %v335
        %v1395 = vpop.f32.mrf.mxu0
        %v1396 = vadd.f32 %v1139, %v1395
        %v1397 = vpop.f32.mrf.mxu0
        %v1398 = vadd.f32 %v1141, %v1397
        %1399 = vmatprep.mubr.f32.mxu0 %v344
        %1400 = vmatmul.mubr.f32.gmra.mxu0 %v343
        %v1401 = vpop.f32.mrf.mxu0
        %v1402 = vadd.f32 %v1145, %v1401
        %v1403 = vpop.f32.mrf.mxu0
        %v1404 = vadd.f32 %v1147, %v1403
        %1405 = vmatprep.mubr.f32.mxu0 %v352
        %1406 = vmatmul.mubr.f32.gmra.mxu0 %v351
        %v1407 = vpop.f32.mrf.mxu0
        %v1408 = vadd.f32 %v1151, %v1407
        %v1409 = vpop.f32.mrf.mxu0
        %v1410 = vadd.f32 %v1153, %v1409
        %1411 = vmatprep.mubr.f32.mxu0 %v360
        %1412 = vmatmul.mubr.f32.gmra.mxu0 %v359
        %v1413 = vpop.f32.mrf.mxu0
        %v1414 = vadd.f32 %v1157, %v1413
        %v1415 = vpop.f32.mrf.mxu0
        %v1416 = vadd.f32 %v1159, %v1415
        %1417 = vmatprep.mubr.f32.mxu0 %v368
        %1418 = vmatmul.mubr.f32.gmra.mxu0 %v367
        %v1419 = vpop.f32.mrf.mxu0
        %v1420 = vadd.f32 %v1163, %v1419
        %v1421 = vpop.f32.mrf.mxu0
        %v1422 = vadd.f32 %v1165, %v1421
        %1423 = vmatprep.mubr.f32.mxu0 %v376
        %1424 = vmatmul.mubr.f32.gmra.mxu0 %v375
        %v1425 = vpop.f32.mrf.mxu0
        %v1426 = vadd.f32 %v1169, %v1425
        %v1427 = vpop.f32.mrf.mxu0
        %v1428 = vadd.f32 %v1171, %v1427
        %1429 = vmatprep.mubr.f32.mxu0 %v384
        %1430 = vmatmul.mubr.f32.gmra.mxu0 %v383
        %v1431 = vpop.f32.mrf.mxu0
        %v1432 = vadd.f32 %v1175, %v1431
        %v1433 = vpop.f32.mrf.mxu0
        %v1434 = vadd.f32 %v1177, %v1433
        %1435 = vmatprep.mubr.f32.mxu0 %v392
        %1436 = vmatmul.mubr.f32.gmra.mxu0 %v391
        %v1437 = vpop.f32.mrf.mxu0
        %v1438 = vadd.f32 %v1181, %v1437
        %v1439 = vpop.f32.mrf.mxu0
        %v1440 = vadd.f32 %v1183, %v1439
        %1441 = vmatprep.mubr.f32.mxu0 %v400
        %1442 = vmatmul.mubr.f32.gmra.mxu0 %v399
        %v1443 = vpop.f32.mrf.mxu0
        %v1444 = vadd.f32 %v1187, %v1443
        %v1445 = vpop.f32.mrf.mxu0
        %v1446 = vadd.f32 %v1189, %v1445
        %1447 = vmatprep.mubr.f32.mxu0 %v408
        %1448 = vmatmul.mubr.f32.gmra.mxu0 %v407
        %v1449 = vpop.f32.mrf.mxu0
        %v1450 = vadd.f32 %v1193, %v1449
        %v1451 = vpop.f32.mrf.mxu0
        %v1452 = vadd.f32 %v1195, %v1451
        %1453 = vmatprep.mubr.f32.mxu0 %v416
        %1454 = vmatmul.mubr.f32.gmra.mxu0 %v415
        %v1455 = vpop.f32.mrf.mxu0
        %v1456 = vadd.f32 %v1199, %v1455
        %v1457 = vpop.f32.mrf.mxu0
        %v1458 = vadd.f32 %v1201, %v1457
        %1459 = vmatprep.mubr.f32.mxu0 %v424
        %1460 = vmatmul.mubr.f32.gmra.mxu0 %v423
        %v1461 = vpop.f32.mrf.mxu0
        %v1462 = vadd.f32 %v1205, %v1461
        %v1463 = vpop.f32.mrf.mxu0
        %v1464 = vadd.f32 %v1207, %v1463
        %1465 = vmatprep.mubr.f32.mxu0 %v432
        %1466 = vmatmul.mubr.f32.gmra.mxu0 %v431
        %v1467 = vpop.f32.mrf.mxu0
        %v1468 = vadd.f32 %v1211, %v1467
        %v1469 = vpop.f32.mrf.mxu0
        %v1470 = vadd.f32 %v1213, %v1469
        %1471 = vmatprep.mubr.f32.mxu0 %v440
        %1472 = vmatmul.mubr.f32.gmra.mxu0 %v439
        %v1473 = vpop.f32.mrf.mxu0
        %v1474 = vadd.f32 %v1217, %v1473
        %v1475 = vpop.f32.mrf.mxu0
        %v1476 = vadd.f32 %v1219, %v1475
        %1477 = vmatprep.mubr.f32.mxu0 %v448
        %1478 = vmatmul.mubr.f32.gmra.mxu0 %v447
        %v1479 = vpop.f32.mrf.mxu0
        %v1480 = vadd.f32 %v1223, %v1479
        %v1481 = vpop.f32.mrf.mxu0
        %v1482 = vadd.f32 %v1225, %v1481
        %1483 = vmatprep.mubr.f32.mxu0 %v456
        %1484 = vmatmul.mubr.f32.gmra.mxu0 %v455
        %v1485 = vpop.f32.mrf.mxu0
        %v1486 = vadd.f32 %v1229, %v1485
        %v1487 = vpop.f32.mrf.mxu0
        %v1488 = vadd.f32 %v1231, %v1487
        %1489 = vmatprep.mubr.f32.mxu0 %v464
        %1490 = vmatmul.mubr.f32.gmra.mxu0 %v463
        %v1491 = vpop.f32.mrf.mxu0
        %v1492 = vadd.f32 %v1235, %v1491
        %v1493 = vpop.f32.mrf.mxu0
        %v1494 = vadd.f32 %v1237, %v1493
        %1495 = vmatprep.mubr.f32.mxu0 %v472
        %1496 = vmatmul.mubr.f32.gmra.mxu0 %v471
        %v1497 = vpop.f32.mrf.mxu0
        %v1498 = vadd.f32 %v1241, %v1497
        %v1499 = vpop.f32.mrf.mxu0
        %v1500 = vadd.f32 %v1243, %v1499
        %1501 = vdwg.mxu0
        %1502 = vmatprep.subr.mxu0 %v698
        %1503 = vmatpush1.msra.mxu0 %v697
        %1504 = vmatprep.subr.mxu0 %v696
        %1505 = vmatpush1.msra.mxu0 %v695
        %1506 = vmatprep.subr.mxu0 %v694
        %1507 = vmatpush1.msra.mxu0 %v693
        %1508 = vmatprep.subr.mxu0 %v692
        %1509 = vmatpush1.msra.mxu0 %v691
        %1510 = vmatprep.subr.mxu0 %v690
        %1511 = vmatpush1.msra.mxu0 %v689
        %1512 = vmatprep.subr.mxu0 %v688
        %1513 = vmatpush1.msra.mxu0 %v687
        %1514 = vmatprep.subr.mxu0 %v686
        %1515 = vmatpush1.msra.mxu0 %v685
        %1516 = vmatprep.subr.mxu0 %v684
        %1517 = vmatpush1.msra.mxu0 %v683
        %1518 = vmatprep.subr.mxu0 %v682
        %1519 = vmatpush1.msra.mxu0 %v681
        %1520 = vmatprep.subr.mxu0 %v680
        %1521 = vmatpush1.msra.mxu0 %v679
        %1522 = vmatprep.subr.mxu0 %v678
        %1523 = vmatpush1.msra.mxu0 %v677
        %1524 = vmatprep.subr.mxu0 %v676
        %1525 = vmatpush1.msra.mxu0 %v675
        %1526 = vmatprep.subr.mxu0 %v674
        %1527 = vmatpush1.msra.mxu0 %v673
        %1528 = vmatprep.subr.mxu0 %v672
        %1529 = vmatpush1.msra.mxu0 %v671
        %1530 = vmatprep.subr.mxu0 %v670
        %1531 = vmatpush1.msra.mxu0 %v669
        %1532 = vmatprep.subr.mxu0 %v668
        %1533 = vmatpush1.msra.mxu0 %v667
        %1534 = vmatprep.subr.mxu0 %v730
        %1535 = vmatpush2.msra.mxu0 %v729
        %1536 = vmatprep.subr.mxu0 %v728
        %1537 = vmatpush2.msra.mxu0 %v727
        %1538 = vmatprep.subr.mxu0 %v726
        %1539 = vmatpush2.msra.mxu0 %v725
        %1540 = vmatprep.subr.mxu0 %v724
        %1541 = vmatpush2.msra.mxu0 %v723
        %1542 = vmatprep.subr.mxu0 %v722
        %1543 = vmatpush2.msra.mxu0 %v721
        %1544 = vmatprep.subr.mxu0 %v720
        %1545 = vmatpush2.msra.mxu0 %v719
        %1546 = vmatprep.subr.mxu0 %v718
        %1547 = vmatpush2.msra.mxu0 %v717
        %1548 = vmatprep.subr.mxu0 %v716
        %1549 = vmatpush2.msra.mxu0 %v715
        %1550 = vmatprep.subr.mxu0 %v714
        %1551 = vmatpush2.msra.mxu0 %v713
        %1552 = vmatprep.subr.mxu0 %v712
        %1553 = vmatpush2.msra.mxu0 %v711
        %1554 = vmatprep.subr.mxu0 %v710
        %1555 = vmatpush2.msra.mxu0 %v709
        %1556 = vmatprep.subr.mxu0 %v708
        %1557 = vmatpush2.msra.mxu0 %v707
        %1558 = vmatprep.subr.mxu0 %v706
        %1559 = vmatpush2.msra.mxu0 %v705
        %1560 = vmatprep.subr.mxu0 %v704
        %1561 = vmatpush2.msra.mxu0 %v703
        %1562 = vmatprep.subr.mxu0 %v702
        %1563 = vmatpush2.msra.mxu0 %v701
        %1564 = vmatprep.subr.mxu0 %v700
        %1565 = vmatpush2.msra.mxu0 %v699
        %1566 = vmatprep.mubr.f32.mxu0 %v226
        %1567 = vmatmul.mubr.f32.gmra.mxu0 %v225
        %v1568 = vpop.f32.mrf.mxu0
        %v1569 = vadd.f32 %v1312, %v1568
        %v1570 = vpop.f32.mrf.mxu0
        %v1571 = vadd.f32 %v1314, %v1570
        %1572 = vmatprep.mubr.f32.mxu0 %v234
        %1573 = vmatmul.mubr.f32.gmra.mxu0 %v233
        %v1574 = vpop.f32.mrf.mxu0
        %v1575 = vadd.f32 %v1318, %v1574
        %v1576 = vpop.f32.mrf.mxu0
        %v1577 = vadd.f32 %v1320, %v1576
        %1578 = vmatprep.mubr.f32.mxu0 %v242
        %1579 = vmatmul.mubr.f32.gmra.mxu0 %v241
        %v1580 = vpop.f32.mrf.mxu0
        %v1581 = vadd.f32 %v1324, %v1580
        %v1582 = vpop.f32.mrf.mxu0
        %v1583 = vadd.f32 %v1326, %v1582
        %1584 = vmatprep.mubr.f32.mxu0 %v250
        %1585 = vmatmul.mubr.f32.gmra.mxu0 %v249
        %v1586 = vpop.f32.mrf.mxu0
        %v1587 = vadd.f32 %v1330, %v1586
        %v1588 = vpop.f32.mrf.mxu0
        %v1589 = vadd.f32 %v1332, %v1588
        %1590 = vmatprep.mubr.f32.mxu0 %v258
        %1591 = vmatmul.mubr.f32.gmra.mxu0 %v257
        %v1592 = vpop.f32.mrf.mxu0
        %v1593 = vadd.f32 %v1336, %v1592
        %v1594 = vpop.f32.mrf.mxu0
        %v1595 = vadd.f32 %v1338, %v1594
        %1596 = vmatprep.mubr.f32.mxu0 %v266
        %1597 = vmatmul.mubr.f32.gmra.mxu0 %v265
        %v1598 = vpop.f32.mrf.mxu0
        %v1599 = vadd.f32 %v1342, %v1598
        %v1600 = vpop.f32.mrf.mxu0
        %v1601 = vadd.f32 %v1344, %v1600
        %1602 = vmatprep.mubr.f32.mxu0 %v274
        %1603 = vmatmul.mubr.f32.gmra.mxu0 %v273
        %v1604 = vpop.f32.mrf.mxu0
        %v1605 = vadd.f32 %v1348, %v1604
        %v1606 = vpop.f32.mrf.mxu0
        %v1607 = vadd.f32 %v1350, %v1606
        %1608 = vmatprep.mubr.f32.mxu0 %v282
        %1609 = vmatmul.mubr.f32.gmra.mxu0 %v281
        %v1610 = vpop.f32.mrf.mxu0
        %v1611 = vadd.f32 %v1354, %v1610
        %v1612 = vpop.f32.mrf.mxu0
        %v1613 = vadd.f32 %v1356, %v1612
        %1614 = vmatprep.mubr.f32.mxu0 %v290
        %1615 = vmatmul.mubr.f32.gmra.mxu0 %v289
        %v1616 = vpop.f32.mrf.mxu0
        %v1617 = vadd.f32 %v1360, %v1616
        %v1618 = vpop.f32.mrf.mxu0
        %v1619 = vadd.f32 %v1362, %v1618
        %1620 = vmatprep.mubr.f32.mxu0 %v298
        %1621 = vmatmul.mubr.f32.gmra.mxu0 %v297
        %v1622 = vpop.f32.mrf.mxu0
        %v1623 = vadd.f32 %v1366, %v1622
        %v1624 = vpop.f32.mrf.mxu0
        %v1625 = vadd.f32 %v1368, %v1624
        %1626 = vmatprep.mubr.f32.mxu0 %v306
        %1627 = vmatmul.mubr.f32.gmra.mxu0 %v305
        %v1628 = vpop.f32.mrf.mxu0
        %v1629 = vadd.f32 %v1372, %v1628
        %v1630 = vpop.f32.mrf.mxu0
        %v1631 = vadd.f32 %v1374, %v1630
        %1632 = vmatprep.mubr.f32.mxu0 %v314
        %1633 = vmatmul.mubr.f32.gmra.mxu0 %v313
        %v1634 = vpop.f32.mrf.mxu0
        %v1635 = vadd.f32 %v1378, %v1634
        %v1636 = vpop.f32.mrf.mxu0
        %v1637 = vadd.f32 %v1380, %v1636
        %1638 = vmatprep.mubr.f32.mxu0 %v322
        %1639 = vmatmul.mubr.f32.gmra.mxu0 %v321
        %v1640 = vpop.f32.mrf.mxu0
        %v1641 = vadd.f32 %v1384, %v1640
        %v1642 = vpop.f32.mrf.mxu0
        %v1643 = vadd.f32 %v1386, %v1642
        %1644 = vmatprep.mubr.f32.mxu0 %v330
        %1645 = vmatmul.mubr.f32.gmra.mxu0 %v329
        %v1646 = vpop.f32.mrf.mxu0
        %v1647 = vadd.f32 %v1390, %v1646
        %v1648 = vpop.f32.mrf.mxu0
        %v1649 = vadd.f32 %v1392, %v1648
        %1650 = vmatprep.mubr.f32.mxu0 %v338
        %1651 = vmatmul.mubr.f32.gmra.mxu0 %v337
        %v1652 = vpop.f32.mrf.mxu0
        %v1653 = vadd.f32 %v1396, %v1652
        %v1654 = vpop.f32.mrf.mxu0
        %v1655 = vadd.f32 %v1398, %v1654
        %1656 = vmatprep.mubr.f32.mxu0 %v346
        %1657 = vmatmul.mubr.f32.gmra.mxu0 %v345
        %v1658 = vpop.f32.mrf.mxu0
        %v1659 = vadd.f32 %v1402, %v1658
        %v1660 = vpop.f32.mrf.mxu0
        %v1661 = vadd.f32 %v1404, %v1660
        %1662 = vmatprep.mubr.f32.mxu0 %v354
        %1663 = vmatmul.mubr.f32.gmra.mxu0 %v353
        %v1664 = vpop.f32.mrf.mxu0
        %v1665 = vadd.f32 %v1408, %v1664
        %v1666 = vpop.f32.mrf.mxu0
        %v1667 = vadd.f32 %v1410, %v1666
        %1668 = vmatprep.mubr.f32.mxu0 %v362
        %1669 = vmatmul.mubr.f32.gmra.mxu0 %v361
        %v1670 = vpop.f32.mrf.mxu0
        %v1671 = vadd.f32 %v1414, %v1670
        %v1672 = vpop.f32.mrf.mxu0
        %v1673 = vadd.f32 %v1416, %v1672
        %1674 = vmatprep.mubr.f32.mxu0 %v370
        %1675 = vmatmul.mubr.f32.gmra.mxu0 %v369
        %v1676 = vpop.f32.mrf.mxu0
        %v1677 = vadd.f32 %v1420, %v1676
        %v1678 = vpop.f32.mrf.mxu0
        %v1679 = vadd.f32 %v1422, %v1678
        %1680 = vmatprep.mubr.f32.mxu0 %v378
        %1681 = vmatmul.mubr.f32.gmra.mxu0 %v377
        %v1682 = vpop.f32.mrf.mxu0
        %v1683 = vadd.f32 %v1426, %v1682
        %v1684 = vpop.f32.mrf.mxu0
        %v1685 = vadd.f32 %v1428, %v1684
        %1686 = vmatprep.mubr.f32.mxu0 %v386
        %1687 = vmatmul.mubr.f32.gmra.mxu0 %v385
        %v1688 = vpop.f32.mrf.mxu0
        %v1689 = vadd.f32 %v1432, %v1688
        %v1690 = vpop.f32.mrf.mxu0
        %v1691 = vadd.f32 %v1434, %v1690
        %1692 = vmatprep.mubr.f32.mxu0 %v394
        %1693 = vmatmul.mubr.f32.gmra.mxu0 %v393
        %v1694 = vpop.f32.mrf.mxu0
        %v1695 = vadd.f32 %v1438, %v1694
        %v1696 = vpop.f32.mrf.mxu0
        %v1697 = vadd.f32 %v1440, %v1696
        %1698 = vmatprep.mubr.f32.mxu0 %v402
        %1699 = vmatmul.mubr.f32.gmra.mxu0 %v401
        %v1700 = vpop.f32.mrf.mxu0
        %v1701 = vadd.f32 %v1444, %v1700
        %v1702 = vpop.f32.mrf.mxu0
        %v1703 = vadd.f32 %v1446, %v1702
        %1704 = vmatprep.mubr.f32.mxu0 %v410
        %1705 = vmatmul.mubr.f32.gmra.mxu0 %v409
        %v1706 = vpop.f32.mrf.mxu0
        %v1707 = vadd.f32 %v1450, %v1706
        %v1708 = vpop.f32.mrf.mxu0
        %v1709 = vadd.f32 %v1452, %v1708
        %1710 = vmatprep.mubr.f32.mxu0 %v418
        %1711 = vmatmul.mubr.f32.gmra.mxu0 %v417
        %v1712 = vpop.f32.mrf.mxu0
        %v1713 = vadd.f32 %v1456, %v1712
        %v1714 = vpop.f32.mrf.mxu0
        %v1715 = vadd.f32 %v1458, %v1714
        %1716 = vmatprep.mubr.f32.mxu0 %v426
        %1717 = vmatmul.mubr.f32.gmra.mxu0 %v425
        %v1718 = vpop.f32.mrf.mxu0
        %v1719 = vadd.f32 %v1462, %v1718
        %v1720 = vpop.f32.mrf.mxu0
        %v1721 = vadd.f32 %v1464, %v1720
        %1722 = vmatprep.mubr.f32.mxu0 %v434
        %1723 = vmatmul.mubr.f32.gmra.mxu0 %v433
        %v1724 = vpop.f32.mrf.mxu0
        %v1725 = vadd.f32 %v1468, %v1724
        %v1726 = vpop.f32.mrf.mxu0
        %v1727 = vadd.f32 %v1470, %v1726
        %1728 = vmatprep.mubr.f32.mxu0 %v442
        %1729 = vmatmul.mubr.f32.gmra.mxu0 %v441
        %v1730 = vpop.f32.mrf.mxu0
        %v1731 = vadd.f32 %v1474, %v1730
        %v1732 = vpop.f32.mrf.mxu0
        %v1733 = vadd.f32 %v1476, %v1732
        %1734 = vmatprep.mubr.f32.mxu0 %v450
        %1735 = vmatmul.mubr.f32.gmra.mxu0 %v449
        %v1736 = vpop.f32.mrf.mxu0
        %v1737 = vadd.f32 %v1480, %v1736
        %v1738 = vpop.f32.mrf.mxu0
        %v1739 = vadd.f32 %v1482, %v1738
        %1740 = vmatprep.mubr.f32.mxu0 %v458
        %1741 = vmatmul.mubr.f32.gmra.mxu0 %v457
        %v1742 = vpop.f32.mrf.mxu0
        %v1743 = vadd.f32 %v1486, %v1742
        %v1744 = vpop.f32.mrf.mxu0
        %v1745 = vadd.f32 %v1488, %v1744
        %1746 = vmatprep.mubr.f32.mxu0 %v466
        %1747 = vmatmul.mubr.f32.gmra.mxu0 %v465
        %v1748 = vpop.f32.mrf.mxu0
        %v1749 = vadd.f32 %v1492, %v1748
        %v1750 = vpop.f32.mrf.mxu0
        %v1751 = vadd.f32 %v1494, %v1750
        %1752 = vmatprep.mubr.f32.mxu0 %v474
        %1753 = vmatmul.mubr.f32.gmra.mxu0 %v473
        %v1754 = vpop.f32.mrf.mxu0
        %v1755 = vadd.f32 %v1498, %v1754
        %v1756 = vpop.f32.mrf.mxu0
        %v1757 = vadd.f32 %v1500, %v1756
        %1758 = vdwg.mxu0
        %1759 = vst [vmem:[%s208] sm:$0xff] %v1569
        %1760 = vst [vmem:[%s208 + $0x8] sm:$0xff] %v1571
        %1761 = vst [vmem:[%s208 + $0x10] sm:$0xff] %v1575
        %1762 = vst [vmem:[%s208 + $0x18] sm:$0xff] %v1577
        %1763 = vst [vmem:[%s208 + $0x20] sm:$0xff] %v1581
        %1764 = vst [vmem:[%s208 + $0x28] sm:$0xff] %v1583
        %1765 = vst [vmem:[%s208 + $0x30] sm:$0xff] %v1587
        %1766 = vst [vmem:[%s208 + $0x38] sm:$0xff] %v1589
        %1767 = vst [vmem:[%s208 + $0x40] sm:$0xff] %v1593
        %1768 = vst [vmem:[%s208 + $0x48] sm:$0xff] %v1595
        %1769 = vst [vmem:[%s208 + $0x50] sm:$0xff] %v1599
        %1770 = vst [vmem:[%s208 + $0x58] sm:$0xff] %v1601
        %1771 = vst [vmem:[%s208 + $0x60] sm:$0xff] %v1605
        %1772 = vst [vmem:[%s208 + $0x68] sm:$0xff] %v1607
        %1773 = vst [vmem:[%s208 + $0x70] sm:$0xff] %v1611
        %1774 = vst [vmem:[%s208 + $0x78] sm:$0xff] %v1613
        %1775 = vst [vmem:[%s208 + $0x80] sm:$0xff] %v1617
        %1776 = vst [vmem:[%s208 + $0x88] sm:$0xff] %v1619
        %1777 = vst [vmem:[%s208 + $0x90] sm:$0xff] %v1623
        %1778 = vst [vmem:[%s208 + $0x98] sm:$0xff] %v1625
        %1779 = vst [vmem:[%s208 + $0xa0] sm:$0xff] %v1629
        %1780 = vst [vmem:[%s208 + $0xa8] sm:$0xff] %v1631
        %1781 = vst [vmem:[%s208 + $0xb0] sm:$0xff] %v1635
        %1782 = vst [vmem:[%s208 + $0xb8] sm:$0xff] %v1637
        %1783 = vst [vmem:[%s208 + $0xc0] sm:$0xff] %v1641
        %1784 = vst [vmem:[%s208 + $0xc8] sm:$0xff] %v1643
        %1785 = vst [vmem:[%s208 + $0xd0] sm:$0xff] %v1647
        %1786 = vst [vmem:[%s208 + $0xd8] sm:$0xff] %v1649
        %1787 = vst [vmem:[%s208 + $0xe0] sm:$0xff] %v1653
        %1788 = vst [vmem:[%s208 + $0xe8] sm:$0xff] %v1655
        %1789 = vst [vmem:[%s208 + $0xf0] sm:$0xff] %v1659
        %1790 = vst [vmem:[%s208 + $0xf8] sm:$0xff] %v1661
        %1791 = vst [vmem:[%s208 + $0x100] sm:$0xff] %v1665
        %1792 = vst [vmem:[%s208 + $0x108] sm:$0xff] %v1667
        %1793 = vst [vmem:[%s208 + $0x110] sm:$0xff] %v1671
        %1794 = vst [vmem:[%s208 + $0x118] sm:$0xff] %v1673
        %1795 = vst [vmem:[%s208 + $0x120] sm:$0xff] %v1677
        %1796 = vst [vmem:[%s208 + $0x128] sm:$0xff] %v1679
        %1797 = vst [vmem:[%s208 + $0x130] sm:$0xff] %v1683
        %1798 = vst [vmem:[%s208 + $0x138] sm:$0xff] %v1685
        %1799 = vst [vmem:[%s208 + $0x140] sm:$0xff] %v1689
        %1800 = vst [vmem:[%s208 + $0x148] sm:$0xff] %v1691
        %1801 = vst [vmem:[%s208 + $0x150] sm:$0xff] %v1695
        %1802 = vst [vmem:[%s208 + $0x158] sm:$0xff] %v1697
        %1803 = vst [vmem:[%s208 + $0x160] sm:$0xff] %v1701
        %1804 = vst [vmem:[%s208 + $0x168] sm:$0xff] %v1703
        %1805 = vst [vmem:[%s208 + $0x170] sm:$0xff] %v1707
        %1806 = vst [vmem:[%s208 + $0x178] sm:$0xff] %v1709
        %1807 = vst [vmem:[%s208 + $0x180] sm:$0xff] %v1713
        %1808 = vst [vmem:[%s208 + $0x188] sm:$0xff] %v1715
        %1809 = vst [vmem:[%s208 + $0x190] sm:$0xff] %v1719
        %1810 = vst [vmem:[%s208 + $0x198] sm:$0xff] %v1721
        %1811 = vst [vmem:[%s208 + $0x1a0] sm:$0xff] %v1725
        %1812 = vst [vmem:[%s208 + $0x1a8] sm:$0xff] %v1727
        %1813 = vst [vmem:[%s208 + $0x1b0] sm:$0xff] %v1731
        %1814 = vst [vmem:[%s208 + $0x1b8] sm:$0xff] %v1733
        %1815 = vst [vmem:[%s208 + $0x1c0] sm:$0xff] %v1737
        %1816 = vst [vmem:[%s208 + $0x1c8] sm:$0xff] %v1739
        %1817 = vst [vmem:[%s208 + $0x1d0] sm:$0xff] %v1743
        %1818 = vst [vmem:[%s208 + $0x1d8] sm:$0xff] %v1745
        %1819 = vst [vmem:[%s208 + $0x1e0] sm:$0xff] %v1749
        %1820 = vst [vmem:[%s208 + $0x1e8] sm:$0xff] %v1751
        %1821 = vst [vmem:[%s208 + $0x1f0] sm:$0xff] %v1755
        %1822 = vst [vmem:[%s208 + $0x1f8] sm:$0xff] %v1757
        %v1823 = vld [vmem:[%s208] sm:$0xff]
        %v1824 = vld [vmem:[%s208 + $0x8] sm:$0xff]
        %v1825 = vld [vmem:[%s208 + $0x10] sm:$0xff]
        %v1826 = vld [vmem:[%s208 + $0x18] sm:$0xff]
        %v1827 = vld [vmem:[%s208 + $0x20] sm:$0xff]
        %v1828 = vld [vmem:[%s208 + $0x28] sm:$0xff]
        %v1829 = vld [vmem:[%s208 + $0x30] sm:$0xff]
        %v1830 = vld [vmem:[%s208 + $0x38] sm:$0xff]
        %v1831 = vld [vmem:[%s208 + $0x40] sm:$0xff]
        %v1832 = vld [vmem:[%s208 + $0x48] sm:$0xff]
        %v1833 = vld [vmem:[%s208 + $0x50] sm:$0xff]
        %v1834 = vld [vmem:[%s208 + $0x58] sm:$0xff]
        %v1835 = vld [vmem:[%s208 + $0x60] sm:$0xff]
        %v1836 = vld [vmem:[%s208 + $0x68] sm:$0xff]
        %v1837 = vld [vmem:[%s208 + $0x70] sm:$0xff]
        %v1838 = vld [vmem:[%s208 + $0x78] sm:$0xff]
        %v1839 = vld [vmem:[%s208 + $0x80] sm:$0xff]
        %v1840 = vld [vmem:[%s208 + $0x88] sm:$0xff]
        %v1841 = vld [vmem:[%s208 + $0x90] sm:$0xff]
        %v1842 = vld [vmem:[%s208 + $0x98] sm:$0xff]
        %v1843 = vld [vmem:[%s208 + $0xa0] sm:$0xff]
        %v1844 = vld [vmem:[%s208 + $0xa8] sm:$0xff]
        %v1845 = vld [vmem:[%s208 + $0xb0] sm:$0xff]
        %v1846 = vld [vmem:[%s208 + $0xb8] sm:$0xff]
        %v1847 = vld [vmem:[%s208 + $0xc0] sm:$0xff]
        %v1848 = vld [vmem:[%s208 + $0xc8] sm:$0xff]
        %v1849 = vld [vmem:[%s208 + $0xd0] sm:$0xff]
        %v1850 = vld [vmem:[%s208 + $0xd8] sm:$0xff]
        %v1851 = vld [vmem:[%s208 + $0xe0] sm:$0xff]
        %v1852 = vld [vmem:[%s208 + $0xe8] sm:$0xff]
        %v1853 = vld [vmem:[%s208 + $0xf0] sm:$0xff]
        %v1854 = vld [vmem:[%s208 + $0xf8] sm:$0xff]
        %v1855 = vld [vmem:[%s208 + $0x100] sm:$0xff]
        %v1856 = vld [vmem:[%s208 + $0x108] sm:$0xff]
        %v1857 = vld [vmem:[%s208 + $0x110] sm:$0xff]
        %v1858 = vld [vmem:[%s208 + $0x118] sm:$0xff]
        %v1859 = vld [vmem:[%s208 + $0x120] sm:$0xff]
        %v1860 = vld [vmem:[%s208 + $0x128] sm:$0xff]
        %v1861 = vld [vmem:[%s208 + $0x130] sm:$0xff]
        %v1862 = vld [vmem:[%s208 + $0x138] sm:$0xff]
        %v1863 = vld [vmem:[%s208 + $0x140] sm:$0xff]
        %v1864 = vld [vmem:[%s208 + $0x148] sm:$0xff]
        %v1865 = vld [vmem:[%s208 + $0x150] sm:$0xff]
        %v1866 = vld [vmem:[%s208 + $0x158] sm:$0xff]
        %v1867 = vld [vmem:[%s208 + $0x160] sm:$0xff]
        %v1868 = vld [vmem:[%s208 + $0x168] sm:$0xff]
        %v1869 = vld [vmem:[%s208 + $0x170] sm:$0xff]
        %v1870 = vld [vmem:[%s208 + $0x178] sm:$0xff]
        %v1871 = vld [vmem:[%s208 + $0x180] sm:$0xff]
        %v1872 = vld [vmem:[%s208 + $0x188] sm:$0xff]
        %v1873 = vld [vmem:[%s208 + $0x190] sm:$0xff]
        %v1874 = vld [vmem:[%s208 + $0x198] sm:$0xff]
        %v1875 = vld [vmem:[%s208 + $0x1a0] sm:$0xff]
        %v1876 = vld [vmem:[%s208 + $0x1a8] sm:$0xff]
        %v1877 = vld [vmem:[%s208 + $0x1b0] sm:$0xff]
        %v1878 = vld [vmem:[%s208 + $0x1b8] sm:$0xff]
        %v1879 = vld [vmem:[%s208 + $0x1c0] sm:$0xff]
        %v1880 = vld [vmem:[%s208 + $0x1c8] sm:$0xff]
        %v1881 = vld [vmem:[%s208 + $0x1d0] sm:$0xff]
        %v1882 = vld [vmem:[%s208 + $0x1d8] sm:$0xff]
        %v1883 = vld [vmem:[%s208 + $0x1e0] sm:$0xff]
        %v1884 = vld [vmem:[%s208 + $0x1e8] sm:$0xff]
        %v1885 = vld [vmem:[%s208 + $0x1f0] sm:$0xff]
        %v1886 = vld [vmem:[%s208 + $0x1f8] sm:$0xff]
        %v1887 = vmax.f32 %v1823, 0.0
        %v1888 = vmax.f32 %v1824, 0.0
        %v1889 = vmax.f32 %v1825, 0.0
        %v1890 = vmax.f32 %v1826, 0.0
        %v1891 = vmax.f32 %v1827, 0.0
        %v1892 = vmax.f32 %v1828, 0.0
        %v1893 = vmax.f32 %v1829, 0.0
        %v1894 = vmax.f32 %v1830, 0.0
        %v1895 = vmax.f32 %v1831, 0.0
        %v1896 = vmax.f32 %v1832, 0.0
        %v1897 = vmax.f32 %v1833, 0.0
        %v1898 = vmax.f32 %v1834, 0.0
        %v1899 = vmax.f32 %v1835, 0.0
        %v1900 = vmax.f32 %v1836, 0.0
        %v1901 = vmax.f32 %v1837, 0.0
        %v1902 = vmax.f32 %v1838, 0.0
        %v1903 = vmax.f32 %v1839, 0.0
        %v1904 = vmax.f32 %v1840, 0.0
        %v1905 = vmax.f32 %v1841, 0.0
        %v1906 = vmax.f32 %v1842, 0.0
        %v1907 = vmax.f32 %v1843, 0.0
        %v1908 = vmax.f32 %v1844, 0.0
        %v1909 = vmax.f32 %v1845, 0.0
        %v1910 = vmax.f32 %v1846, 0.0
        %v1911 = vmax.f32 %v1847, 0.0
        %v1912 = vmax.f32 %v1848, 0.0
        %v1913 = vmax.f32 %v1849, 0.0
        %v1914 = vmax.f32 %v1850, 0.0
        %v1915 = vmax.f32 %v1851, 0.0
        %v1916 = vmax.f32 %v1852, 0.0
        %v1917 = vmax.f32 %v1853, 0.0
        %v1918 = vmax.f32 %v1854, 0.0
        %v1919 = vmax.f32 %v1855, 0.0
        %v1920 = vmax.f32 %v1856, 0.0
        %v1921 = vmax.f32 %v1857, 0.0
        %v1922 = vmax.f32 %v1858, 0.0
        %v1923 = vmax.f32 %v1859, 0.0
        %v1924 = vmax.f32 %v1860, 0.0
        %v1925 = vmax.f32 %v1861, 0.0
        %v1926 = vmax.f32 %v1862, 0.0
        %v1927 = vmax.f32 %v1863, 0.0
        %v1928 = vmax.f32 %v1864, 0.0
        %v1929 = vmax.f32 %v1865, 0.0
        %v1930 = vmax.f32 %v1866, 0.0
        %v1931 = vmax.f32 %v1867, 0.0
        %v1932 = vmax.f32 %v1868, 0.0
        %v1933 = vmax.f32 %v1869, 0.0
        %v1934 = vmax.f32 %v1870, 0.0
        %v1935 = vmax.f32 %v1871, 0.0
        %v1936 = vmax.f32 %v1872, 0.0
        %v1937 = vmax.f32 %v1873, 0.0
        %v1938 = vmax.f32 %v1874, 0.0
        %v1939 = vmax.f32 %v1875, 0.0
        %v1940 = vmax.f32 %v1876, 0.0
        %v1941 = vmax.f32 %v1877, 0.0
        %v1942 = vmax.f32 %v1878, 0.0
        %v1943 = vmax.f32 %v1879, 0.0
        %v1944 = vmax.f32 %v1880, 0.0
        %v1945 = vmax.f32 %v1881, 0.0
        %v1946 = vmax.f32 %v1882, 0.0
        %v1947 = vmax.f32 %v1883, 0.0
        %v1948 = vmax.f32 %v1884, 0.0
        %v1949 = vmax.f32 %v1885, 0.0
        %v1950 = vmax.f32 %v1886, 0.0
        %1951 = vst [vmem:[%s215] sm:$0xff] %v1887
        %1952 = vst [vmem:[%s215 + $0x8] sm:$0xff] %v1888
        %1953 = vst [vmem:[%s215 + $0x10] sm:$0xff] %v1889
        %1954 = vst [vmem:[%s215 + $0x18] sm:$0xff] %v1890
        %1955 = vst [vmem:[%s215 + $0x20] sm:$0xff] %v1891
        %1956 = vst [vmem:[%s215 + $0x28] sm:$0xff] %v1892
        %1957 = vst [vmem:[%s215 + $0x30] sm:$0xff] %v1893
        %1958 = vst [vmem:[%s215 + $0x38] sm:$0xff] %v1894
        %1959 = vst [vmem:[%s215 + $0x40] sm:$0xff] %v1895
        %1960 = vst [vmem:[%s215 + $0x48] sm:$0xff] %v1896
        %1961 = vst [vmem:[%s215 + $0x50] sm:$0xff] %v1897
        %1962 = vst [vmem:[%s215 + $0x58] sm:$0xff] %v1898
        %1963 = vst [vmem:[%s215 + $0x60] sm:$0xff] %v1899
        %1964 = vst [vmem:[%s215 + $0x68] sm:$0xff] %v1900
        %1965 = vst [vmem:[%s215 + $0x70] sm:$0xff] %v1901
        %1966 = vst [vmem:[%s215 + $0x78] sm:$0xff] %v1902
        %1967 = vst [vmem:[%s215 + $0x80] sm:$0xff] %v1903
        %1968 = vst [vmem:[%s215 + $0x88] sm:$0xff] %v1904
        %1969 = vst [vmem:[%s215 + $0x90] sm:$0xff] %v1905
        %1970 = vst [vmem:[%s215 + $0x98] sm:$0xff] %v1906
        %1971 = vst [vmem:[%s215 + $0xa0] sm:$0xff] %v1907
        %1972 = vst [vmem:[%s215 + $0xa8] sm:$0xff] %v1908
        %1973 = vst [vmem:[%s215 + $0xb0] sm:$0xff] %v1909
        %1974 = vst [vmem:[%s215 + $0xb8] sm:$0xff] %v1910
        %1975 = vst [vmem:[%s215 + $0xc0] sm:$0xff] %v1911
        %1976 = vst [vmem:[%s215 + $0xc8] sm:$0xff] %v1912
        %1977 = vst [vmem:[%s215 + $0xd0] sm:$0xff] %v1913
        %1978 = vst [vmem:[%s215 + $0xd8] sm:$0xff] %v1914
        %1979 = vst [vmem:[%s215 + $0xe0] sm:$0xff] %v1915
        %1980 = vst [vmem:[%s215 + $0xe8] sm:$0xff] %v1916
        %1981 = vst [vmem:[%s215 + $0xf0] sm:$0xff] %v1917
        %1982 = vst [vmem:[%s215 + $0xf8] sm:$0xff] %v1918
        %1983 = vst [vmem:[%s215 + $0x100] sm:$0xff] %v1919
        %1984 = vst [vmem:[%s215 + $0x108] sm:$0xff] %v1920
        %1985 = vst [vmem:[%s215 + $0x110] sm:$0xff] %v1921
        %1986 = vst [vmem:[%s215 + $0x118] sm:$0xff] %v1922
        %1987 = vst [vmem:[%s215 + $0x120] sm:$0xff] %v1923
        %1988 = vst [vmem:[%s215 + $0x128] sm:$0xff] %v1924
        %1989 = vst [vmem:[%s215 + $0x130] sm:$0xff] %v1925
        %1990 = vst [vmem:[%s215 + $0x138] sm:$0xff] %v1926
        %1991 = vst [vmem:[%s215 + $0x140] sm:$0xff] %v1927
        %1992 = vst [vmem:[%s215 + $0x148] sm:$0xff] %v1928
        %1993 = vst [vmem:[%s215 + $0x150] sm:$0xff] %v1929
        %1994 = vst [vmem:[%s215 + $0x158] sm:$0xff] %v1930
        %1995 = vst [vmem:[%s215 + $0x160] sm:$0xff] %v1931
        %1996 = vst [vmem:[%s215 + $0x168] sm:$0xff] %v1932
        %1997 = vst [vmem:[%s215 + $0x170] sm:$0xff] %v1933
        %1998 = vst [vmem:[%s215 + $0x178] sm:$0xff] %v1934
        %1999 = vst [vmem:[%s215 + $0x180] sm:$0xff] %v1935
        %2000 = vst [vmem:[%s215 + $0x188] sm:$0xff] %v1936
        %2001 = vst [vmem:[%s215 + $0x190] sm:$0xff] %v1937
        %2002 = vst [vmem:[%s215 + $0x198] sm:$0xff] %v1938
        %2003 = vst [vmem:[%s215 + $0x1a0] sm:$0xff] %v1939
        %2004 = vst [vmem:[%s215 + $0x1a8] sm:$0xff] %v1940
        %2005 = vst [vmem:[%s215 + $0x1b0] sm:$0xff] %v1941
        %2006 = vst [vmem:[%s215 + $0x1b8] sm:$0xff] %v1942
        %2007 = vst [vmem:[%s215 + $0x1c0] sm:$0xff] %v1943
        %2008 = vst [vmem:[%s215 + $0x1c8] sm:$0xff] %v1944
        %2009 = vst [vmem:[%s215 + $0x1d0] sm:$0xff] %v1945
        %2010 = vst [vmem:[%s215 + $0x1d8] sm:$0xff] %v1946
        %2011 = vst [vmem:[%s215 + $0x1e0] sm:$0xff] %v1947
        %2012 = vst [vmem:[%s215 + $0x1e8] sm:$0xff] %v1948
        %2013 = vst [vmem:[%s215 + $0x1f0] sm:$0xff] %v1949
        %2014 = vst [vmem:[%s215 + $0x1f8] sm:$0xff] %v1950
        %s2015 = sand.u32 %s80, 1
        %s2016 = scalar_lea.sflag [#allocation4], %s2015
        %s2017 = sand.u32 %s80, 1
        %s2018 = smul.addr %s2017, 512
        %s2019 = scalar_lea.vmem [#allocation7], %s2018
        %s2020 = sand.u32 %s106, 1
        %s2021 = scalar_lea.sflag [#allocation9], %s2020
        %s2022 = sand.u32 %s106, 1
        %s2023 = smul.addr %s2022, 512
        %s2024 = scalar_lea.vmem [#allocation8], %s2023
        // Predicated region
        $region37: #{tpu_custom_call.1} parent=27 // pred_check
          %p2025 = pneg %p90
        $region38: #{tpu_custom_call.1} parent=27 // pred_check_branch
          %2027 = sbr.rel (%p2025) target = $region40
        $region39: #{tpu_custom_call.1} parent=27 // pred_region
          %s2028 = smul.u32 32, %s25
          %s2030 = ssub.s32 8192, 8192
          %2031 = vsyncadd %s2016, %s2030
          %s2032 = smul.addr %s2028, 2
          %s2033 = smul.addr %s2032, 128
          %s2034 = scalar_lea.hbm %s2, %s2033
          %s2035 = sshll.u32 %s2019, 4
          %s2036 = int_to_ptr.vmem [resolvable:$true] %s2035
          %2041 = dma.vmem_to_hbm [thread:$0]  %s2036, 8192, %s2034, %s2016, 256, 256, 16
        $region40: #{tpu_custom_call.1} parent=27 // pred_fallthru
          _
        // Predicated region
        $region41: #{tpu_custom_call.1} parent=27 // pred_check
          %p2042 = pneg %p116
        $region42: #{tpu_custom_call.1} parent=27 // pred_check_branch
          %2044 = sbr.rel (%p2042) target = $region44
        $region43: #{tpu_custom_call.1} parent=27 // pred_region
          %s2045 = smul.u32 32, %s25
          %s2047 = ssub.s32 8192, 8192
          %2048 = vsyncadd %s2021, %s2047
          %s2049 = smul.addr %s2045, 2
          %s2050 = smul.addr %s2049, 128
          %s2051 = scalar_lea.hbm %s3, %s2050
          %s2052 = sshll.u32 %s2024, 4
          %s2053 = int_to_ptr.vmem [resolvable:$true] %s2052
          %2058 = dma.vmem_to_hbm [thread:$0]  %s2053, 8192, %s2051, %s2021, 256, 256, 16
        $region44: #{tpu_custom_call.1} parent=27 // pred_fallthru
          _
      $region28: #{tpu_custom_call.1} parent=5 // pred_fallthru
        _
      %p2059 = scmp.le.s32.totalorder 2, %s20
      // Predicated region
      $region45: #{tpu_custom_call.1} parent=5 // pred_check
        %p2060 = pneg %p2059
      $region46: #{tpu_custom_call.1} parent=5 // pred_check_branch
        %2062 = sbr.rel (%p2060) target = $region48
      $region47: #{tpu_custom_call.1} parent=5 // pred_region
        %s2063 = ssub.s32 %s20, 2
        // Predicated region
        $region49: #{tpu_custom_call.1} parent=47 // pred_check
          %p2064 = pneg %p96
        $region50: #{tpu_custom_call.1} parent=47 // pred_check_branch
          %2066 = sbr.rel (%p2064) target = $region52
        $region51: #{tpu_custom_call.1} parent=47 // pred_region
          %s2067 = sand.u32 %s81, 1
          %s2068 = scalar_lea.sflag [#allocation4], %s2067
          %s2069 = sand.u32 %s81, 1
          %s2070 = smul.addr %s2069, 512
          %s2071 = scalar_lea.vmem [#allocation7], %s2070
          %2072 = dma.done %s2068, 8192
        $region52: #{tpu_custom_call.1} parent=47 // pred_fallthru
          _
        // Predicated region
        $region53: #{tpu_custom_call.1} parent=47 // pred_check
          %p2073 = pneg %p122
        $region54: #{tpu_custom_call.1} parent=47 // pred_check_branch
          %2075 = sbr.rel (%p2073) target = $region56
        $region55: #{tpu_custom_call.1} parent=47 // pred_region
          %s2076 = sand.u32 %s107, 1
          %s2077 = scalar_lea.sflag [#allocation9], %s2076
          %s2078 = sand.u32 %s107, 1
          %s2079 = smul.addr %s2078, 512
          %s2080 = scalar_lea.vmem [#allocation8], %s2079
          %2081 = dma.done %s2077, 8192
        $region56: #{tpu_custom_call.1} parent=47 // pred_fallthru
          _
      $region48: #{tpu_custom_call.1} parent=5 // pred_fallthru
        _
    $region6: #{tpu_custom_call.1} parent=1 // loop_footer
      %s24 = sadd.s32 1, %s20
    $region7: #{tpu_custom_call.1} parent=1 // loop_footer_branch
      %19 = sbr.rel target = $region3
    $region8: #{tpu_custom_call.1} parent=1 // loop_exit
      _
    %2082 = vsyncpa [#allocation3], 1
    %s2083 = scalar_lea.sflag [#allocation3], 1
    %2084 = vsyncpa %s2083, 1
    %2085 = vsyncpa [#allocation6], 1
    %2086 = vsyncpa [#allocation4], 1
    %s2087 = scalar_lea.sflag [#allocation4], 1
    %2088 = vsyncpa %s2087, 1
    %2089 = vsyncpa [#allocation9], 1
    %s2090 = scalar_lea.sflag [#allocation9], 1
    %2091 = vsyncpa %s2090, 1

</llo_original>
